<compile_context>
chip_gen: v7x
topology: tpu7x:2x2x1
jax: 0.10.0
libtpu: 0.0.40
codegen_flags: <defaults>
</compile_context>

<pallas_src>
import functools

import jax
import jax.numpy as jnp
from jax.experimental import pallas as pl
from jax.experimental.pallas import tpu as pltpu


# ----------------------------------------------------------------------------------
# Hardware detection (generation-aware tiling / dtype policy)
# ----------------------------------------------------------------------------------
def _device_kind():
    try:
        return jax.devices()[0].device_kind.lower()
    except Exception:
        return ""


def _detect_vmem_capacity_bytes():
    kind = _device_kind()
    big_vmem_part = ("v5" in kind) or ("v6" in kind)      # 128 MiB VMEM per TC
    default = (128 if big_vmem_part else 64) * 1024 * 1024
    cap = None
    try:
        cap = int(pltpu.get_tpu_info().vmem_capacity_bytes)
    except Exception:
        cap = None
    if cap is None or cap <= 0:
        return default
    if not big_vmem_part:
        # v7x has 64 MiB per TensorCore; be conservative on unknown parts too.
        cap = min(cap, 64 * 1024 * 1024)
    return cap


def _detect_prefers_bf16():
    # v5e (and older) have no bf16 VALU: bf16 there only adds casts.
    kind = _device_kind()
    return not any(t in kind for t in ("v2", "v3", "v4", "v5"))


# ----------------------------------------------------------------------------------
# Tiling
# ----------------------------------------------------------------------------------
def _round_up(v, m):
    return ((v + m - 1) // m) * m


def _choose_batch_tile(batch, c_in, d_out, n, itemsize, vmem_budget_bytes,
                       max_tile=256):
    """Pick (TB, B_pad).

    B_pad = round_up(batch, 8); TB is a multiple of 8 that divides B_pad, chosen as
    large as the estimated per-step VMEM working set allows (never falls back to an
    un-budgeted full-batch tile)."""
    b_pad = _round_up(max(batch, 1), 8)

    def est_bytes(tb):
        big = tb * d_out * n                                 # one (TB,D,N) plane
        return (2 * tb * c_in * n * itemsize                 # x tile, double-buffered
                + 2 * c_in * d_out * n * itemsize            # w slab, double-buffered
                + big * itemsize                             # priors scratch
                + 4 * big * 4                                # big temporaries (as f32)
                + 2 * tb * d_out * 4)                        # output block

    best = 8
    tb = 8
    while tb <= min(max_tile, b_pad):
        if b_pad % tb == 0 and est_bytes(tb) <= vmem_budget_bytes:
            best = tb
        tb += 8
    return best, b_pad


# ----------------------------------------------------------------------------------
# Kernel
# ----------------------------------------------------------------------------------
def _make_routing_kernel(num_iterations):
    def kernel(x_ref, w_ref, out_ref, priors_ref):
        # x_ref     : (TB, C, N)   batch tile, lane-dense over route nodes N
        # w_ref     : (1, C, D, N) weights of capsule k = program_id(1)
        # out_ref   : (1, TB, D)   f32 output slice for (capsule k, batch tile bi)
        # priors_ref: (TB, D, N)   VMEM scratch -- explicit home for priors
        f32 = jnp.float32
        x = x_ref[...]
        w = w_ref[0]
        if x.dtype != w.dtype:                 # defensive; host casts both already
            x = x.astype(w.dtype)
        tb, c_in, n = x.shape

        # --- priors[b,d,n] = sum_c x[b,c,n] * w[c,d,n] ------------------------------
        # Single chained expression stored ONCE into the scratch: the (TB,1,N) x-slice
        # broadcast over D is folded into each multiply (never materialized alone) and
        # only ~2 big temporaries (accumulator + current product) are live at a time.
        acc = x[:, 0:1, :] * w[0:1]                           # (TB,1,N)*(1,D,N)
        for c in range(1, c_in):
            acc = acc + x[:, c:c + 1, :] * w[c:c + 1]
        priors_ref[...] = acc.astype(priors_ref.dtype)
        pdt = priors_ref.dtype

        inv_n = f32(1.0 / n)

        def refined_recip(v):
            # EUP reciprocal seed + one Newton step on a tiny (TB,1) operand:
            # divide leaves the VALU slot, accuracy stays ~f32.
            r = pl.reciprocal(v, approx=True)
            return r * (2.0 - v * r)

        def squash(s):                         # s: (TB, D) f32, squash over last axis
            sq = jnp.sum(s * s, axis=-1, keepdims=True)               # (TB, 1)
            # == sq/(1+sq) * s/sqrt(sq); one fewer divide, 0 (not NaN) at s == 0.
            return s * (jnp.sqrt(sq) * refined_recip(1.0 + sq))

        def weighted_sum_over_n(probs_bn):     # (TB, N) -> (TB, D), f32 accumulation
            prod = probs_bn.astype(pdt)[:, None, :] * priors_ref[...]
            return jnp.sum(prod.astype(f32), axis=2)

        def delta_logits(v_bd):                # (TB, D) -> (TB, N), f32 accumulation
            prod = priors_ref[...] * v_bd.astype(pdt)[:, :, None]
            return jnp.sum(prod.astype(f32), axis=1)

        # --- routing iteration 0: logits are all zero -> softmax over N is 1/N ------
        s = jnp.sum(priors_ref[...].astype(f32), axis=2) * inv_n      # (TB, D)
        v = squash(s)                                                 # (TB, D) f32
        logits = delta_logits(v) if num_iterations > 1 else None      # (TB, N) f32

        # --- remaining routing iterations (statically unrolled) ----------------------
        for it in range(1, num_iterations):
            m = jnp.max(logits, axis=-1, keepdims=True)               # (TB, 1)
            e = jnp.exp(logits - m)                                   # (TB, N), EUP
            probs = e * refined_recip(jnp.sum(e, axis=-1, keepdims=True))
            s = weighted_sum_over_n(probs)                            # (TB, D)
            v = squash(s)
            if it != num_iterations - 1:
                logits = logits + delta_logits(v)

        out_ref[0] = v.astype(out_ref.dtype)                          # (TB, D)

    return kernel


@functools.lru_cache(maxsize=None)
def _build_routing_call(K, B_pad, TB, C, D, N, compute_dtype_name, num_iterations,
                        vmem_limit_bytes):
    compute_dtype = jnp.dtype(compute_dtype_name)
    nb = B_pad // TB
    kernel = _make_routing_kernel(num_iterations)
    return pl.pallas_call(
        kernel,
        out_shape=jax.ShapeDtypeStruct((K, B_pad, D), jnp.float32),
        grid_spec=pltpu.PrefetchScalarGridSpec(
            num_scalar_prefetch=0,
            # K innermost: the x tile's block index is constant along it, so the batch
            # tile is DMA'd once and stays VMEM-resident while the K small per-capsule
            # weight slabs stream through.
            grid=(nb, K),
            in_specs=[
                pl.BlockSpec((TB, C, N), lambda bi, k: (bi, 0, 0)),
                pl.BlockSpec((1, C, D, N), lambda bi, k: (k, 0, 0, 0)),
            ],
            out_specs=pl.BlockSpec((1, TB, D), lambda bi, k: (k, bi, 0)),
            scratch_shapes=[pltpu.VMEM((TB, D, N), compute_dtype)],
        ),
        compiler_params=pltpu.CompilerParams(
            dimension_semantics=("parallel", "parallel"),
            vmem_limit_bytes=vmem_limit_bytes,
        ),
    )


# ----------------------------------------------------------------------------------
# Module wrapper
# ----------------------------------------------------------------------------------
class CapsuleLayerPallas:
    """Pallas equivalent of CapsuleLayer for num_route_nodes != -1 (dynamic routing)."""

    def __init__(self, num_capsules, num_route_nodes, in_channels, out_channels,
                 key, num_iterations=3, compute_dtype=None):
        # TODO(synk): the num_route_nodes == -1 branch (ModuleList of per-capsule
        # Conv2d + squash) is not implemented here; only the routing branch is.
        assert num_route_nodes != -1
        assert num_iterations >= 1
        self.num_capsules = num_capsules
        self.num_route_nodes = num_route_nodes
        self.in_channels = in_channels
        self.out_channels = out_channels
        self.num_iterations = num_iterations

        if compute_dtype is None:
            compute_dtype = jnp.bfloat16 if _detect_prefers_bf16() else jnp.float32
        self.compute_dtype = compute_dtype
        self._vmem_limit_bytes = (3 * _detect_vmem_capacity_bytes()) // 4

        # torch.randn(num_capsules, num_route_nodes, in_channels, out_channels)
        self.route_weights = jax.random.normal(
            key, (num_capsules, num_route_nodes, in_channels, out_channels),
            dtype=jnp.float32)
        # Hoisted out of the forward: one-time relayout to (K, C, D, N) so the kernel
        # sees lane-dense (D, N) weight planes, plus optional bf16 cast so the
        # per-capsule weight DMA halves on v6e/v7x.
        self._route_weights_cdn = jnp.transpose(
            self.route_weights, (0, 2, 3, 1)).astype(self.compute_dtype)

    def __call__(self, x):
        # x: (B, in_channels, num_route_nodes) -- consumed directly, no transpose.
        B, C, N = x.shape
        assert C == self.in_channels and N == self.num_route_nodes
        K, D = self.num_capsules, self.out_channels

        x = x.astype(self.compute_dtype)
        itemsize = jnp.dtype(self.compute_dtype).itemsize
        TB, B_pad = _choose_batch_tile(
            B, C, D, N, itemsize, self._vmem_limit_bytes - (4 << 20))
        if B_pad != B:
            # Zero-padding is benign: zero priors -> zero outputs (no NaN in the
            # kernel's squash form); padded rows are sliced off below.
            x = jnp.pad(x, ((0, B_pad - B), (0, 0), (0, 0)))

        call = _build_routing_call(K, B_pad, TB, C, D, N,
                                   jnp.dtype(self.compute_dtype).name,
                                   self.num_iterations, self._vmem_limit_bytes)
        out_kbd = call(x, self._route_weights_cdn)[:, :B, :]          # (K, B, D) f32

        # torch: outputs.squeeze() -> (K,B,D); .transpose(0,1) -> (B,K,D);
        #        final .transpose(1,2) -> (B,D,K)   (standard B>1, K>1 path; tiny).
        return jnp.transpose(out_kbd, (1, 2, 0))


# ----------------------------------------------------------------------------------
# Pure-JAX reference mirroring the PyTorch forward exactly (routing branch)
# ----------------------------------------------------------------------------------
def _squash_lastdim_ref(t, axis=-1):
    sq = jnp.sum(t * t, axis=axis, keepdims=True)
    scale = sq / (1.0 + sq)
    return scale * t / jnp.sqrt(sq)


def capsule_layer_ref(x, route_weights, num_iterations=3):
    x_t = jnp.transpose(x, (0, 2, 1))                                          # (B,N,C)
    priors = jnp.einsum('bnc,kncd->kbnd', x_t, route_weights)[:, :, :, None, :]
    logits = jnp.zeros_like(priors)
    outputs = None
    for i in range(num_iterations):
        m = jnp.max(logits, axis=2, keepdims=True)
        e = jnp.exp(logits - m)
        probs = e / jnp.sum(e, axis=2, keepdims=True)
        outputs = _squash_lastdim_ref(
            jnp.sum(probs * priors, axis=2, keepdims=True), axis=-1)
        if i != num_iterations - 1:
            logits = logits + jnp.sum(priors * outputs, axis=-1, keepdims=True)
    out = jnp.squeeze(outputs)                 # (K, B, D)
    out = jnp.transpose(out, (1, 0, 2))        # (B, K, D)
    return jnp.transpose(out, (0, 2, 1))       # (B, D, K)


# ----------------------------------------------------------------------------------
if __name__ == "__main__":
    # Small shapes consistent with the routing-capsule config ('128_800_8_16' scaled
    # down): num_capsules=8, num_route_nodes=32, in_channels=8, out_channels=16, B=2.
    B, K, N, C_IN, C_OUT = 2, 8, 32, 8, 16

    key = jax.random.PRNGKey(0)
    k_w, k_x = jax.random.split(key)
    x = jax.random.normal(k_x, (B, C_IN, N), dtype=jnp.float32)

    # ---- f32 path: strict check against the exact torch-mirror reference. ----------
    # Tolerance 2e-3: lane-dense reduction order, the algebraically-identical squash
    # form, the closed-form uniform first softmax, and the Newton-refined EUP
    # reciprocal pass benign f32 rounding differences through 3 routing iterations.
    layer_f32 = CapsuleLayerPallas(num_capsules=K, num_route_nodes=N,
                                   in_channels=C_IN, out_channels=C_OUT,
                                   key=k_w, compute_dtype=jnp.float32)
    out_f32 = jax.block_until_ready(layer_f32(x))
    ref = jax.block_until_ready(capsule_layer_ref(x, layer_f32.route_weights))
    assert out_f32.shape == (B, C_OUT, K), out_f32.shape
    assert jnp.allclose(out_f32, ref, rtol=2e-3, atol=2e-3), \
        float(jnp.max(jnp.abs(out_f32 - ref)))

    # ---- bf16 big-tensor path (the v6e/v7x lever): loose check. ---------------------
    # bf16 storage of x/w/priors plus 3 routing iterations costs ~1-2 decimal digits;
    # reductions / softmax / squash stay in f32 inside the kernel.
    layer_bf16 = CapsuleLayerPallas(num_capsules=K, num_route_nodes=N,
                                    in_channels=C_IN, out_channels=C_OUT,
                                    key=k_w, compute_dtype=jnp.bfloat16)
    out_bf16 = jax.block_until_ready(layer_bf16(x))
    assert out_bf16.shape == (B, C_OUT, K), out_bf16.shape
    assert jnp.allclose(out_bf16, ref, rtol=1e-1, atol=1e-1), \
        float(jnp.max(jnp.abs(out_bf16 - ref)))

    # ---- auto path (dtype / VMEM budget picked from the detected TPU generation). ---
    layer_auto = CapsuleLayerPallas(num_capsules=K, num_route_nodes=N,
                                    in_channels=C_IN, out_channels=C_OUT, key=k_w)
    jax.block_until_ready(layer_auto(x))

    print("KERNEL_OK")
</pallas_src>

<mosaic_0001>
module attributes {stable_mosaic.version = 11 : i64} {
  func.func @kernel(%arg0: i32, %arg1: i32, %arg2: memref<8x8x32xf32, #tpu.memory_space<vmem>>, %arg3: memref<1x8x16x32xf32, #tpu.memory_space<vmem>>, %arg4: memref<1x8x16xf32, #tpu.memory_space<vmem>>, %arg5: memref<8x16x32xf32, #tpu.memory_space<vmem>>) attributes {dimension_semantics = [#tpu.dimension_semantics<parallel>, #tpu.dimension_semantics<parallel>], iteration_bounds = array<i64: 1, 8>, scalar_prefetch = 0 : i64, scratch_operands = 1 : i64, tpu.core_type = #tpu.core_type<tc>, window_params = [{transform_indices = @transform_0, window_bounds = array<i64: 8, 8, 32>}, {transform_indices = @transform_1, window_bounds = array<i64: 1, 8, 16, 32>}, {transform_indices = @transform_2, window_bounds = array<i64: 1, 8, 16>}]} {
    %c0 = arith.constant 0 : index
    %c0_0 = arith.constant 0 : index
    %c0_1 = arith.constant 0 : index
    %0 = vector.load %arg2[%c0, %c0_0, %c0_1] : memref<8x8x32xf32, #tpu.memory_space<vmem>>, vector<8x8x32xf32>
    %c0_2 = arith.constant 0 : index
    %c0_3 = arith.constant 0 : index
    %c0_4 = arith.constant 0 : index
    %c0_5 = arith.constant 0 : index
    %1 = vector.load %arg3[%c0_2, %c0_3, %c0_4, %c0_5] : memref<1x8x16x32xf32, #tpu.memory_space<vmem>>, vector<1x8x16x32xf32>
    %2 = vector.shape_cast %1 : vector<1x8x16x32xf32> to vector<8x16x32xf32>
    %3 = vector.extract_strided_slice %0 {offsets = [0, 0, 0], sizes = [8, 1, 32], strides = [1, 1, 1]} : vector<8x8x32xf32> to vector<8x1x32xf32>
    %4 = vector.extract_strided_slice %2 {offsets = [0, 0, 0], sizes = [1, 16, 32], strides = [1, 1, 1]} : vector<8x16x32xf32> to vector<1x16x32xf32>
    %5 = vector.broadcast %3 : vector<8x1x32xf32> to vector<8x16x32xf32>
    %6 = vector.broadcast %4 : vector<1x16x32xf32> to vector<8x16x32xf32>
    %7 = arith.mulf %5, %6 : vector<8x16x32xf32>
    %8 = vector.extract_strided_slice %0 {offsets = [0, 1, 0], sizes = [8, 1, 32], strides = [1, 1, 1]} : vector<8x8x32xf32> to vector<8x1x32xf32>
    %9 = vector.extract_strided_slice %2 {offsets = [1, 0, 0], sizes = [1, 16, 32], strides = [1, 1, 1]} : vector<8x16x32xf32> to vector<1x16x32xf32>
    %10 = vector.broadcast %8 : vector<8x1x32xf32> to vector<8x16x32xf32>
    %11 = vector.broadcast %9 : vector<1x16x32xf32> to vector<8x16x32xf32>
    %12 = arith.mulf %10, %11 : vector<8x16x32xf32>
    %13 = arith.addf %7, %12 : vector<8x16x32xf32>
    %14 = vector.extract_strided_slice %0 {offsets = [0, 2, 0], sizes = [8, 1, 32], strides = [1, 1, 1]} : vector<8x8x32xf32> to vector<8x1x32xf32>
    %15 = vector.extract_strided_slice %2 {offsets = [2, 0, 0], sizes = [1, 16, 32], strides = [1, 1, 1]} : vector<8x16x32xf32> to vector<1x16x32xf32>
    %16 = vector.broadcast %14 : vector<8x1x32xf32> to vector<8x16x32xf32>
    %17 = vector.broadcast %15 : vector<1x16x32xf32> to vector<8x16x32xf32>
    %18 = arith.mulf %16, %17 : vector<8x16x32xf32>
    %19 = arith.addf %13, %18 : vector<8x16x32xf32>
    %20 = vector.extract_strided_slice %0 {offsets = [0, 3, 0], sizes = [8, 1, 32], strides = [1, 1, 1]} : vector<8x8x32xf32> to vector<8x1x32xf32>
    %21 = vector.extract_strided_slice %2 {offsets = [3, 0, 0], sizes = [1, 16, 32], strides = [1, 1, 1]} : vector<8x16x32xf32> to vector<1x16x32xf32>
    %22 = vector.broadcast %20 : vector<8x1x32xf32> to vector<8x16x32xf32>
    %23 = vector.broadcast %21 : vector<1x16x32xf32> to vector<8x16x32xf32>
    %24 = arith.mulf %22, %23 : vector<8x16x32xf32>
    %25 = arith.addf %19, %24 : vector<8x16x32xf32>
    %26 = vector.extract_strided_slice %0 {offsets = [0, 4, 0], sizes = [8, 1, 32], strides = [1, 1, 1]} : vector<8x8x32xf32> to vector<8x1x32xf32>
    %27 = vector.extract_strided_slice %2 {offsets = [4, 0, 0], sizes = [1, 16, 32], strides = [1, 1, 1]} : vector<8x16x32xf32> to vector<1x16x32xf32>
    %28 = vector.broadcast %26 : vector<8x1x32xf32> to vector<8x16x32xf32>
    %29 = vector.broadcast %27 : vector<1x16x32xf32> to vector<8x16x32xf32>
    %30 = arith.mulf %28, %29 : vector<8x16x32xf32>
    %31 = arith.addf %25, %30 : vector<8x16x32xf32>
    %32 = vector.extract_strided_slice %0 {offsets = [0, 5, 0], sizes = [8, 1, 32], strides = [1, 1, 1]} : vector<8x8x32xf32> to vector<8x1x32xf32>
    %33 = vector.extract_strided_slice %2 {offsets = [5, 0, 0], sizes = [1, 16, 32], strides = [1, 1, 1]} : vector<8x16x32xf32> to vector<1x16x32xf32>
    %34 = vector.broadcast %32 : vector<8x1x32xf32> to vector<8x16x32xf32>
    %35 = vector.broadcast %33 : vector<1x16x32xf32> to vector<8x16x32xf32>
    %36 = arith.mulf %34, %35 : vector<8x16x32xf32>
    %37 = arith.addf %31, %36 : vector<8x16x32xf32>
    %38 = vector.extract_strided_slice %0 {offsets = [0, 6, 0], sizes = [8, 1, 32], strides = [1, 1, 1]} : vector<8x8x32xf32> to vector<8x1x32xf32>
    %39 = vector.extract_strided_slice %2 {offsets = [6, 0, 0], sizes = [1, 16, 32], strides = [1, 1, 1]} : vector<8x16x32xf32> to vector<1x16x32xf32>
    %40 = vector.broadcast %38 : vector<8x1x32xf32> to vector<8x16x32xf32>
    %41 = vector.broadcast %39 : vector<1x16x32xf32> to vector<8x16x32xf32>
    %42 = arith.mulf %40, %41 : vector<8x16x32xf32>
    %43 = arith.addf %37, %42 : vector<8x16x32xf32>
    %44 = vector.extract_strided_slice %0 {offsets = [0, 7, 0], sizes = [8, 1, 32], strides = [1, 1, 1]} : vector<8x8x32xf32> to vector<8x1x32xf32>
    %45 = vector.extract_strided_slice %2 {offsets = [7, 0, 0], sizes = [1, 16, 32], strides = [1, 1, 1]} : vector<8x16x32xf32> to vector<1x16x32xf32>
    %46 = vector.broadcast %44 : vector<8x1x32xf32> to vector<8x16x32xf32>
    %47 = vector.broadcast %45 : vector<1x16x32xf32> to vector<8x16x32xf32>
    %48 = arith.mulf %46, %47 : vector<8x16x32xf32>
    %49 = arith.addf %43, %48 : vector<8x16x32xf32>
    %c0_6 = arith.constant 0 : index
    %c0_7 = arith.constant 0 : index
    %c0_8 = arith.constant 0 : index
    %50 = vector.load %arg5[%c0_6, %c0_7, %c0_8] : memref<8x16x32xf32, #tpu.memory_space<vmem>>, vector<8x16x32xf32>
    tpu.vector_store %arg5[%c0_6, %c0_7, %c0_8], %49 {strides = array<i32>} : memref<8x16x32xf32, #tpu.memory_space<vmem>>, vector<8x16x32xf32>,
    %c0_9 = arith.constant 0 : index
    %c0_10 = arith.constant 0 : index
    %c0_11 = arith.constant 0 : index
    %51 = vector.load %arg5[%c0_9, %c0_10, %c0_11] : memref<8x16x32xf32, #tpu.memory_space<vmem>>, vector<8x16x32xf32>
    %cst = arith.constant dense<0.000000e+00> : vector<8x16xf32>
    %52 = vector.multi_reduction <add>, %51, %cst [2] : vector<8x16x32xf32> to vector<8x16xf32>
    %cst_12 = arith.constant 3.125000e-02 : f32
    %53 = vector.broadcast %cst_12 : f32 to vector<8x16xf32>
    %54 = arith.mulf %52, %53 : vector<8x16xf32>
    %55 = arith.mulf %54, %54 : vector<8x16xf32>
    %cst_13 = arith.constant dense<0.000000e+00> : vector<8xf32>
    %56 = vector.multi_reduction <add>, %55, %cst_13 [1] : vector<8x16xf32> to vector<8xf32>
    %57 = vector.shape_cast %56 : vector<8xf32> to vector<8x1xf32>
    %58 = math.sqrt %57 : vector<8x1xf32>
    %cst_14 = arith.constant 1.000000e+00 : f32
    %59 = vector.broadcast %cst_14 : f32 to vector<8x1xf32>
    %60 = arith.addf %59, %57 : vector<8x1xf32>
    %61 = tpu.reciprocal %60 {approx = true} : vector<8x1xf32> -> vector<8x1xf32>
    %62 = arith.mulf %60, %61 : vector<8x1xf32>
    %cst_15 = arith.constant 2.000000e+00 : f32
    %63 = vector.broadcast %cst_15 : f32 to vector<8x1xf32>
    %64 = arith.subf %63, %62 : vector<8x1xf32>
    %65 = arith.mulf %61, %64 : vector<8x1xf32>
    %66 = arith.mulf %58, %65 : vector<8x1xf32>
    %67 = vector.broadcast %66 : vector<8x1xf32> to vector<8x16xf32>
    %68 = arith.mulf %54, %67 : vector<8x16xf32>
    %c0_16 = arith.constant 0 : index
    %c0_17 = arith.constant 0 : index
    %c0_18 = arith.constant 0 : index
    %69 = vector.load %arg5[%c0_16, %c0_17, %c0_18] : memref<8x16x32xf32, #tpu.memory_space<vmem>>, vector<8x16x32xf32>
    %70 = vector.shape_cast %68 : vector<8x16xf32> to vector<8x16x1xf32>
    %71 = vector.broadcast %70 : vector<8x16x1xf32> to vector<8x16x32xf32>
    %72 = arith.mulf %69, %71 : vector<8x16x32xf32>
    %cst_19 = arith.constant dense<0.000000e+00> : vector<8x32xf32>
    %73 = vector.multi_reduction <add>, %72, %cst_19 [1] : vector<8x16x32xf32> to vector<8x32xf32>
    %cst_20 = arith.constant dense<0xFF800000> : vector<8xf32>
    %74 = vector.multi_reduction <maximumf>, %73, %cst_20 [1] : vector<8x32xf32> to vector<8xf32>
    %75 = vector.shape_cast %74 : vector<8xf32> to vector<8x1xf32>
    %76 = vector.broadcast %75 : vector<8x1xf32> to vector<8x32xf32>
    %77 = arith.subf %73, %76 : vector<8x32xf32>
    %78 = math.exp %77 : vector<8x32xf32>
    %cst_21 = arith.constant dense<0.000000e+00> : vector<8xf32>
    %79 = vector.multi_reduction <add>, %78, %cst_21 [1] : vector<8x32xf32> to vector<8xf32>
    %80 = vector.shape_cast %79 : vector<8xf32> to vector<8x1xf32>
    %81 = tpu.reciprocal %80 {approx = true} : vector<8x1xf32> -> vector<8x1xf32>
    %82 = arith.mulf %80, %81 : vector<8x1xf32>
    %cst_22 = arith.constant 2.000000e+00 : f32
    %83 = vector.broadcast %cst_22 : f32 to vector<8x1xf32>
    %84 = arith.subf %83, %82 : vector<8x1xf32>
    %85 = arith.mulf %81, %84 : vector<8x1xf32>
    %86 = vector.broadcast %85 : vector<8x1xf32> to vector<8x32xf32>
    %87 = arith.mulf %78, %86 : vector<8x32xf32>
    %88 = vector.shape_cast %87 : vector<8x32xf32> to vector<8x1x32xf32>
    %c0_23 = arith.constant 0 : index
    %c0_24 = arith.constant 0 : index
    %c0_25 = arith.constant 0 : index
    %89 = vector.load %arg5[%c0_23, %c0_24, %c0_25] : memref<8x16x32xf32, #tpu.memory_space<vmem>>, vector<8x16x32xf32>
    %90 = vector.broadcast %88 : vector<8x1x32xf32> to vector<8x16x32xf32>
    %91 = arith.mulf %90, %89 : vector<8x16x32xf32>
    %cst_26 = arith.constant dense<0.000000e+00> : vector<8x16xf32>
    %92 = vector.multi_reduction <add>, %91, %cst_26 [2] : vector<8x16x32xf32> to vector<8x16xf32>
    %93 = arith.mulf %92, %92 : vector<8x16xf32>
    %cst_27 = arith.constant dense<0.000000e+00> : vector<8xf32>
    %94 = vector.multi_reduction <add>, %93, %cst_27 [1] : vector<8x16xf32> to vector<8xf32>
    %95 = vector.shape_cast %94 : vector<8xf32> to vector<8x1xf32>
    %96 = math.sqrt %95 : vector<8x1xf32>
    %cst_28 = arith.constant 1.000000e+00 : f32
    %97 = vector.broadcast %cst_28 : f32 to vector<8x1xf32>
    %98 = arith.addf %97, %95 : vector<8x1xf32>
    %99 = tpu.reciprocal %98 {approx = true} : vector<8x1xf32> -> vector<8x1xf32>
    %100 = arith.mulf %98, %99 : vector<8x1xf32>
    %cst_29 = arith.constant 2.000000e+00 : f32
    %101 = vector.broadcast %cst_29 : f32 to vector<8x1xf32>
    %102 = arith.subf %101, %100 : vector<8x1xf32>
    %103 = arith.mulf %99, %102 : vector<8x1xf32>
    %104 = arith.mulf %96, %103 : vector<8x1xf32>
    %105 = vector.broadcast %104 : vector<8x1xf32> to vector<8x16xf32>
    %106 = arith.mulf %92, %105 : vector<8x16xf32>
    %c0_30 = arith.constant 0 : index
    %c0_31 = arith.constant 0 : index
    %c0_32 = arith.constant 0 : index
    %107 = vector.load %arg5[%c0_30, %c0_31, %c0_32] : memref<8x16x32xf32, #tpu.memory_space<vmem>>, vector<8x16x32xf32>
    %108 = vector.shape_cast %106 : vector<8x16xf32> to vector<8x16x1xf32>
    %109 = vector.broadcast %108 : vector<8x16x1xf32> to vector<8x16x32xf32>
    %110 = arith.mulf %107, %109 : vector<8x16x32xf32>
    %cst_33 = arith.constant dense<0.000000e+00> : vector<8x32xf32>
    %111 = vector.multi_reduction <add>, %110, %cst_33 [1] : vector<8x16x32xf32> to vector<8x32xf32>
    %112 = arith.addf %73, %111 : vector<8x32xf32>
    %cst_34 = arith.constant dense<0xFF800000> : vector<8xf32>
    %113 = vector.multi_reduction <maximumf>, %112, %cst_34 [1] : vector<8x32xf32> to vector<8xf32>
    %114 = vector.shape_cast %113 : vector<8xf32> to vector<8x1xf32>
    %115 = vector.broadcast %114 : vector<8x1xf32> to vector<8x32xf32>
    %116 = arith.subf %112, %115 : vector<8x32xf32>
    %117 = math.exp %116 : vector<8x32xf32>
    %cst_35 = arith.constant dense<0.000000e+00> : vector<8xf32>
    %118 = vector.multi_reduction <add>, %117, %cst_35 [1] : vector<8x32xf32> to vector<8xf32>
    %119 = vector.shape_cast %118 : vector<8xf32> to vector<8x1xf32>
    %120 = tpu.reciprocal %119 {approx = true} : vector<8x1xf32> -> vector<8x1xf32>
    %121 = arith.mulf %119, %120 : vector<8x1xf32>
    %cst_36 = arith.constant 2.000000e+00 : f32
    %122 = vector.broadcast %cst_36 : f32 to vector<8x1xf32>
    %123 = arith.subf %122, %121 : vector<8x1xf32>
    %124 = arith.mulf %120, %123 : vector<8x1xf32>
    %125 = vector.broadcast %124 : vector<8x1xf32> to vector<8x32xf32>
    %126 = arith.mulf %117, %125 : vector<8x32xf32>
    %127 = vector.shape_cast %126 : vector<8x32xf32> to vector<8x1x32xf32>
    %c0_37 = arith.constant 0 : index
    %c0_38 = arith.constant 0 : index
    %c0_39 = arith.constant 0 : index
    %128 = vector.load %arg5[%c0_37, %c0_38, %c0_39] : memref<8x16x32xf32, #tpu.memory_space<vmem>>, vector<8x16x32xf32>
    %129 = vector.broadcast %127 : vector<8x1x32xf32> to vector<8x16x32xf32>
    %130 = arith.mulf %129, %128 : vector<8x16x32xf32>
    %cst_40 = arith.constant dense<0.000000e+00> : vector<8x16xf32>
    %131 = vector.multi_reduction <add>, %130, %cst_40 [2] : vector<8x16x32xf32> to vector<8x16xf32>
    %132 = arith.mulf %131, %131 : vector<8x16xf32>
    %cst_41 = arith.constant dense<0.000000e+00> : vector<8xf32>
    %133 = vector.multi_reduction <add>, %132, %cst_41 [1] : vector<8x16xf32> to vector<8xf32>
    %134 = vector.shape_cast %133 : vector<8xf32> to vector<8x1xf32>
    %135 = math.sqrt %134 : vector<8x1xf32>
    %cst_42 = arith.constant 1.000000e+00 : f32
    %136 = vector.broadcast %cst_42 : f32 to vector<8x1xf32>
    %137 = arith.addf %136, %134 : vector<8x1xf32>
    %138 = tpu.reciprocal %137 {approx = true} : vector<8x1xf32> -> vector<8x1xf32>
    %139 = arith.mulf %137, %138 : vector<8x1xf32>
    %cst_43 = arith.constant 2.000000e+00 : f32
    %140 = vector.broadcast %cst_43 : f32 to vector<8x1xf32>
    %141 = arith.subf %140, %139 : vector<8x1xf32>
    %142 = arith.mulf %138, %141 : vector<8x1xf32>
    %143 = arith.mulf %135, %142 : vector<8x1xf32>
    %144 = vector.broadcast %143 : vector<8x1xf32> to vector<8x16xf32>
    %145 = arith.mulf %131, %144 : vector<8x16xf32>
    %c0_44 = arith.constant 0 : index
    %c0_45 = arith.constant 0 : index
    %c0_46 = arith.constant 0 : index
    %146 = vector.load %arg4[%c0_44, %c0_45, %c0_46] : memref<1x8x16xf32, #tpu.memory_space<vmem>>, vector<1x8x16xf32>
    %147 = vector.shape_cast %146 : vector<1x8x16xf32> to vector<8x16xf32>
    %148 = vector.shape_cast %145 : vector<8x16xf32> to vector<1x8x16xf32>
    tpu.vector_store %arg4[%c0_44, %c0_45, %c0_46], %148 {strides = array<i32>} : memref<1x8x16xf32, #tpu.memory_space<vmem>>, vector<1x8x16xf32>,
    return
  }
  func.func @transform_0(%arg0: i32, %arg1: i32) -> (i32, i32, i32) {
    %c0_i32 = arith.constant 0 : i32
    %c0_i32_0 = arith.constant 0 : i32
    %c0_i32_1 = arith.constant 0 : i32
    return %arg0, %c0_i32, %c0_i32_0 : i32, i32, i32
  }
  func.func @transform_1(%arg0: i32, %arg1: i32) -> (i32, i32, i32, i32) {
    %c0_i32 = arith.constant 0 : i32
    %c0_i32_0 = arith.constant 0 : i32
    %c0_i32_1 = arith.constant 0 : i32
    %c0_i32_2 = arith.constant 0 : i32
    return %arg1, %c0_i32, %c0_i32_0, %c0_i32_1 : i32, i32, i32, i32
  }
  func.func @transform_2(%arg0: i32, %arg1: i32) -> (i32, i32, i32) {
    %c0_i32 = arith.constant 0 : i32
    %c0_i32_0 = arith.constant 0 : i32
    return %arg1, %arg0, %c0_i32 : i32, i32, i32
  }
}

</mosaic_0001>

<llo_original>
// kernel: tpu_custom_call.1
$region0: #{tpu_custom_call.1}
  #allocation0 [shape = 'u32[]', space=smem, size = 0x4, offset = 0x4, fixed_abs, tag = 'smem constant byte address 0x4 - core index']
  #allocation1 [shape = 'u32[144,128]{1,0:T(1,128)}', space=vmem, size = 0x12000, scoped, tag = 'internal scratch']
  #allocation2 [shape = 'f32[8,16,32]{2,1,0:T(8,128)}', space=vmem, size = 0x10000, scoped, tag = 'scratch operand']
  %s0 = inlined_call_operand.hbm [shape: f32[8,8,32], index: 0, kind: input, shape index: {}]
  %s1 = inlined_call_operand.hbm [shape: f32[8,8,16,32], index: 1, kind: input, shape index: {}]
  %s2 = inlined_call_operand.hbm [shape: f32[8,8,16], index: 2, kind: output, shape index: {}]
  %s3 = sld [smem:[#allocation0]]
  $region49: #{tpu_custom_call.1} parent=0
    _
  %s5 = ssub.s32 1, %s3
  %s6 = scalar_select 0, %s5, %s3
  $region1: #{tpu_custom_call.1} parent=0
    #allocation3 [shape = 'u8[32768]{0}', space=vmem, size = 0x8000, scoped, tag = 'input window, operand 0, single buffered']
    #allocation4 [shape = 's32[2]{0}', space=sflag, size = 0x8, scoped, tag = 'scoped memory for tpu_custom_call.1']
    #allocation5 [shape = 's32[2]{0}', space=sflag, size = 0x8, scoped, tag = 'scoped memory for tpu_custom_call.1']
    #allocation6 [shape = 'u8[131072]{0}', space=vmem, size = 0x20000, scoped, tag = 'input window, operand 1']
    #allocation7 [shape = 's32[2]{0}', space=sflag, size = 0x8, scoped, tag = 'scoped memory for tpu_custom_call.1']
    #allocation8 [shape = 'u8[8192]{0}', space=vmem, size = 0x2000, scoped, tag = 'output window, operand 0']
    %7 = vsyncpa [#allocation4], 0
    %8 = vsyncpa [#allocation7], 0
    %s9 = scalar_lea.sflag [#allocation7], 1
    %10 = vsyncpa %s9, 0
    %11 = vsyncpa [#allocation5], 0
    %s12 = scalar_lea.sflag [#allocation5], 1
    %13 = vsyncpa %s12, 0
    loop: start=0, step=1, limit=10
    $region2: #{tpu_custom_call.1} parent=1 // loop_pre_header
      _
    $region3: #{tpu_custom_call.1} parent=1 // loop_header
      %s15 = sphi 0, %s19
      %p16 = scmp.ge.s32.totalorder %s15, 10
      %s22 = sphi 0, %s34
      %s23 = sphi 0, %s30
      %s24 = sphi 0, %s22
      %s25 = sphi 0, %s23
      %s26 = sphi 0, %s24
      %s27 = sphi 0, %s25
      %s37 = sphi 0, %s39
      %s40 = sphi 0, %s37
      %s41 = sphi 0, %s40
      %s57 = sphi 0, %s41
      %s63 = sphi 0, %s65
      %s66 = sphi 0, %s63
      %s67 = sphi 0, %s66
      %s83 = sphi 0, %s67
      %s91 = sphi 0, %s93
      %s94 = sphi 0, %s91
      %s95 = sphi 0, %s94
      %s111 = sphi 0, %s95
    $region4: #{tpu_custom_call.1} parent=1 // loop_header_branch
      %18 = sbr.rel (%p16) target = $region8
    $region5: #{tpu_custom_call.1} parent=1 // loop_body
      %s20 = ssub.s32 %s15, 1
      %s21 = ssub.s32 %s15, 2
      %s28 = sadd.s32 1, %s23
      %p29 = scmp.ge.s32.totalorder %s28, 8
      %s30 = scalar_select %p29, 0, %s28
      %s31 = sadd.s32 1, %s22
      %s32 = scalar_select %p29, %s31, %s22
      %p33 = scmp.ge.s32.totalorder %s32, 1
      %s34 = scalar_select %p33, 0, %s32
      %s35 = ssub.s32 %s22, %s34
      %p36 = scmp.eq.s32.totalorder %s35, 0
      %s38 = sadd.s32 %s37, 1
      %s39 = scalar_select %p36, %s37, %s38
      %p42 = pneg %p36
      %p43 = scmp.eq.s32.totalorder %s15, 7
      %p44 = por %p42, %p43
      %p45 = scmp.ne.s32.totalorder %s37, %s40
      %p46 = scmp.eq.s32.totalorder %s15, 0
      %p47 = por %p45, %p46
      %p48 = scmp.ne.s32.totalorder %s37, %s40
      %p49 = scmp.eq.s32.totalorder %s20, 7
      %p50 = por %p48, %p49
      %p51 = scmp.ne.s32.totalorder %s40, %s41
      %p52 = scmp.eq.s32.totalorder %s20, 0
      %p53 = por %p51, %p52
      %p54 = scmp.ne.s32.totalorder %s40, %s41
      %p55 = scmp.eq.s32.totalorder %s21, 7
      %p56 = por %p54, %p55
      %p58 = scmp.ne.s32.totalorder %s41, %s57
      %p59 = scmp.eq.s32.totalorder %s21, 0
      %p60 = por %p58, %p59
      %s61 = ssub.s32 %s23, %s30
      %p62 = scmp.eq.s32.totalorder %s61, 0
      %s64 = sadd.s32 %s63, 1
      %s65 = scalar_select %p62, %s63, %s64
      %p68 = pneg %p62
      %p69 = scmp.eq.s32.totalorder %s15, 7
      %p70 = por %p68, %p69
      %p71 = scmp.ne.s32.totalorder %s63, %s66
      %p72 = scmp.eq.s32.totalorder %s15, 0
      %p73 = por %p71, %p72
      %p74 = scmp.ne.s32.totalorder %s63, %s66
      %p75 = scmp.eq.s32.totalorder %s20, 7
      %p76 = por %p74, %p75
      %p77 = scmp.ne.s32.totalorder %s66, %s67
      %p78 = scmp.eq.s32.totalorder %s20, 0
      %p79 = por %p77, %p78
      %p80 = scmp.ne.s32.totalorder %s66, %s67
      %p81 = scmp.eq.s32.totalorder %s21, 7
      %p82 = por %p80, %p81
      %p84 = scmp.ne.s32.totalorder %s67, %s83
      %p85 = scmp.eq.s32.totalorder %s21, 0
      %p86 = por %p84, %p85
      %s87 = ssub.s32 %s23, %s30
      %s88 = ssub.s32 %s22, %s34
      %s89 = sor.u32 %s87, %s88
      %p90 = scmp.eq.s32.totalorder %s89, 0
      %s92 = sadd.s32 %s91, 1
      %s93 = scalar_select %p90, %s91, %s92
      %p96 = pneg %p90
      %p97 = scmp.eq.s32.totalorder %s15, 7
      %p98 = por %p96, %p97
      %p99 = scmp.ne.s32.totalorder %s91, %s94
      %p100 = scmp.eq.s32.totalorder %s15, 0
      %p101 = por %p99, %p100
      %p102 = scmp.ne.s32.totalorder %s91, %s94
      %p103 = scmp.eq.s32.totalorder %s20, 7
      %p104 = por %p102, %p103
      %p105 = scmp.ne.s32.totalorder %s94, %s95
      %p106 = scmp.eq.s32.totalorder %s20, 0
      %p107 = por %p105, %p106
      %p108 = scmp.ne.s32.totalorder %s94, %s95
      %p109 = scmp.eq.s32.totalorder %s21, 7
      %p110 = por %p108, %p109
      %p112 = scmp.ne.s32.totalorder %s95, %s111
      %p113 = scmp.eq.s32.totalorder %s21, 0
      %p114 = por %p112, %p113
      %p115 = scmp.le.s32.totalorder 1, %s15
      %p116 = scmp.lt.s32.totalorder %s15, 9
      %p117 = pnand %p115, %p116
      %p118 = pneg %p117
      // Predicated region
      $region9: #{tpu_custom_call.1} parent=5 // pred_check
        _
      $region10: #{tpu_custom_call.1} parent=5 // pred_check_branch
        %120 = sbr.rel (%p117) target = $region12
      $region11: #{tpu_custom_call.1} parent=5 // pred_region
        %s121 = ssub.s32 %s15, 1
        // Predicated region
        $region13: #{tpu_custom_call.1} parent=11 // pred_check
          %p122 = pneg %p53
        $region14: #{tpu_custom_call.1} parent=11 // pred_check_branch
          %124 = sbr.rel (%p122) target = $region16
        $region15: #{tpu_custom_call.1} parent=11 // pred_region
          %s125 = smul.u32 8, %s24
          %s127 = ssub.s32 1024, 1024
          %128 = vsyncadd [#allocation4], %s127
          %s129 = smul.addr %s125, 128
          %s130 = scalar_lea.hbm %s0, %s129
          %s131 = sshll.u32 [#allocation3], 4
          %s132 = int_to_ptr.vmem [resolvable:$true] %s131
          %137 = dma.hbm_to_vmem [thread:$0]  %s130, 1024, %s132, [#allocation4], 128, 128, 8
        $region16: #{tpu_custom_call.1} parent=11 // pred_fallthru
          _
      $region12: #{tpu_custom_call.1} parent=5 // pred_fallthru
        _
      %p138 = scmp.lt.s32.totalorder %s15, 8
      // Predicated region
      $region17: #{tpu_custom_call.1} parent=5 // pred_check
        %p139 = pneg %p138
      $region18: #{tpu_custom_call.1} parent=5 // pred_check_branch
        %141 = sbr.rel (%p139) target = $region20
      $region19: #{tpu_custom_call.1} parent=5 // pred_region
        // Predicated region
        $region21: #{tpu_custom_call.1} parent=19 // pred_check
          %p142 = pneg %p73
        $region22: #{tpu_custom_call.1} parent=19 // pred_check_branch
          %144 = sbr.rel (%p142) target = $region24
        $region23: #{tpu_custom_call.1} parent=19 // pred_region
          %s145 = sand.u32 %s63, 1
          %s146 = scalar_lea.sflag [#allocation7], %s145
          %s147 = sand.u32 %s63, 1
          %s148 = smul.addr %s147, 128
          %s149 = scalar_lea.vmem [#allocation6], %s148
          %s151 = ssub.s32 2048, 2048
          %152 = vsyncadd %s146, %s151
          %s153 = smul.addr %s23, 16
          %s154 = smul.addr %s153, 128
          %s155 = scalar_lea.hbm %s1, %s154
          %s156 = sshll.u32 %s149, 4
          %s157 = int_to_ptr.vmem [resolvable:$true] %s156
          %162 = dma.hbm_to_vmem [thread:$0]  %s155, 2048, %s157, %s146, 128, 128, 8
        $region24: #{tpu_custom_call.1} parent=19 // pred_fallthru
          _
      $region20: #{tpu_custom_call.1} parent=5 // pred_fallthru
        _
      %p163 = scmp.le.s32.totalorder 1, %s15
      %p164 = scmp.lt.s32.totalorder %s15, 9
      %p165 = pnand %p163, %p164
      %p166 = pneg %p165
      // Predicated region
      $region25: #{tpu_custom_call.1} parent=5 // pred_check
        _
      $region26: #{tpu_custom_call.1} parent=5 // pred_check_branch
        %168 = sbr.rel (%p165) target = $region28
      $region27: #{tpu_custom_call.1} parent=5 // pred_region
        %s169 = ssub.s32 %s15, 1
        // Predicated region
        $region29: #{tpu_custom_call.1} parent=27 // pred_check
          %p170 = pneg %p53
        $region30: #{tpu_custom_call.1} parent=27 // pred_check_branch
          %172 = sbr.rel (%p170) target = $region32
        $region31: #{tpu_custom_call.1} parent=27 // pred_region
          %173 = dma.done [#allocation4], 1024
        $region32: #{tpu_custom_call.1} parent=27 // pred_fallthru
          _
        %s174 = sand.u32 %s66, 1
        %s175 = scalar_lea.sflag [#allocation7], %s174
        %s176 = sand.u32 %s66, 1
        %s177 = smul.addr %s176, 128
        %s178 = scalar_lea.vmem [#allocation6], %s177
        // Predicated region
        $region33: #{tpu_custom_call.1} parent=27 // pred_check
          %p179 = pneg %p79
        $region34: #{tpu_custom_call.1} parent=27 // pred_check_branch
          %181 = sbr.rel (%p179) target = $region36
        $region35: #{tpu_custom_call.1} parent=27 // pred_region
          %182 = dma.done %s175, 2048
        $region36: #{tpu_custom_call.1} parent=27 // pred_fallthru
          _
        %p183 = pneg %p53
        %p184 = pneg %p50
        %s185 = sand.u32 %s66, 1
        %s186 = scalar_lea.sflag [#allocation7], %s185
        %s187 = sand.u32 %s66, 1
        %s188 = smul.addr %s187, 128
        %s189 = scalar_lea.vmem [#allocation6], %s188
        %p190 = pneg %p79
        %p191 = pneg %p76
        %p192 = pneg %p107
        %p193 = pneg %p104
        %s194 = sand.u32 %s94, 1
        %s195 = scalar_lea.sflag [#allocation5], %s194
        %s196 = sand.u32 %s94, 1
        %s197 = smul.addr %s196, 8
        %s198 = scalar_lea.vmem [#allocation8], %s197
        %s199 = smul.u32 8, %s24
        %v200 = vld [vmem:[#allocation3] sm:$0xff]
        %v201 = vld [vmem:[#allocation3 + $0x8] sm:$0xff]
        %v202 = vld [vmem:[#allocation3 + $0x10] sm:$0xff]
        %v203 = vld [vmem:[#allocation3 + $0x18] sm:$0xff]
        %v204 = vld [vmem:[#allocation3 + $0x20] sm:$0xff]
        %v205 = vld [vmem:[#allocation3 + $0x28] sm:$0xff]
        %v206 = vld [vmem:[#allocation3 + $0x30] sm:$0xff]
        %v207 = vld [vmem:[#allocation3 + $0x38] sm:$0xff]
        %v208 = vld [vmem:[%s178] sm:$0xff]
        %v209 = vld [vmem:[%s178 + $0x8] sm:$0xff]
        %v210 = vld [vmem:[%s178 + $0x10] sm:$0xff]
        %v211 = vld [vmem:[%s178 + $0x18] sm:$0xff]
        %v212 = vld [vmem:[%s178 + $0x20] sm:$0xff]
        %v213 = vld [vmem:[%s178 + $0x28] sm:$0xff]
        %v214 = vld [vmem:[%s178 + $0x30] sm:$0xff]
        %v215 = vld [vmem:[%s178 + $0x38] sm:$0xff]
        %v216 = vld [vmem:[%s178 + $0x40] sm:$0xff]
        %v217 = vld [vmem:[%s178 + $0x48] sm:$0xff]
        %v218 = vld [vmem:[%s178 + $0x50] sm:$0xff]
        %v219 = vld [vmem:[%s178 + $0x58] sm:$0xff]
        %v220 = vld [vmem:[%s178 + $0x60] sm:$0xff]
        %v221 = vld [vmem:[%s178 + $0x68] sm:$0xff]
        %v222 = vld [vmem:[%s178 + $0x70] sm:$0xff]
        %v223 = vld [vmem:[%s178 + $0x78] sm:$0xff]
        %v224 = vlaneseq
        %v225 = vshrl.u32 %v224, 7
        %v226 = vsub.s32 0, %v225
        %v227 = vrot.slane %v200, %v226
        %v228 = vlaneseq
        %v229 = vshrl.u32 %v228, 7
        %v230 = vsub.s32 0, %v229
        %v231 = vrot.slane %v201, %v230
        %v232 = vlaneseq
        %v233 = vshrl.u32 %v232, 7
        %v234 = vsub.s32 0, %v233
        %v235 = vrot.slane %v202, %v234
        %v236 = vlaneseq
        %v237 = vshrl.u32 %v236, 7
        %v238 = vsub.s32 0, %v237
        %v239 = vrot.slane %v203, %v238
        %v240 = vlaneseq
        %v241 = vshrl.u32 %v240, 7
        %v242 = vsub.s32 0, %v241
        %v243 = vrot.slane %v204, %v242
        %v244 = vlaneseq
        %v245 = vshrl.u32 %v244, 7
        %v246 = vsub.s32 0, %v245
        %v247 = vrot.slane %v205, %v246
        %v248 = vlaneseq
        %v249 = vshrl.u32 %v248, 7
        %v250 = vsub.s32 0, %v249
        %v251 = vrot.slane %v206, %v250
        %v252 = vlaneseq
        %v253 = vshrl.u32 %v252, 7
        %v254 = vsub.s32 0, %v253
        %v255 = vrot.slane %v207, %v254
        %v256 = vmul.f32 %v227, %v208
        %v257 = vmul.f32 %v227, %v209
        %v258 = vmul.f32 %v231, %v208
        %v259 = vmul.f32 %v231, %v209
        %v260 = vmul.f32 %v235, %v208
        %v261 = vmul.f32 %v235, %v209
        %v262 = vmul.f32 %v239, %v208
        %v263 = vmul.f32 %v239, %v209
        %v264 = vmul.f32 %v243, %v208
        %v265 = vmul.f32 %v243, %v209
        %v266 = vmul.f32 %v247, %v208
        %v267 = vmul.f32 %v247, %v209
        %v268 = vmul.f32 %v251, %v208
        %v269 = vmul.f32 %v251, %v209
        %v270 = vmul.f32 %v255, %v208
        %v271 = vmul.f32 %v255, %v209
        %v272 = vlaneseq
        %v273 = vshrl.u32 %v272, 7
        %v274 = vsub.s32 1, %v273
        %v275 = vrot.slane %v200, %v274
        %v276 = vlaneseq
        %v277 = vshrl.u32 %v276, 7
        %v278 = vsub.s32 1, %v277
        %v279 = vrot.slane %v201, %v278
        %v280 = vlaneseq
        %v281 = vshrl.u32 %v280, 7
        %v282 = vsub.s32 1, %v281
        %v283 = vrot.slane %v202, %v282
        %v284 = vlaneseq
        %v285 = vshrl.u32 %v284, 7
        %v286 = vsub.s32 1, %v285
        %v287 = vrot.slane %v203, %v286
        %v288 = vlaneseq
        %v289 = vshrl.u32 %v288, 7
        %v290 = vsub.s32 1, %v289
        %v291 = vrot.slane %v204, %v290
        %v292 = vlaneseq
        %v293 = vshrl.u32 %v292, 7
        %v294 = vsub.s32 1, %v293
        %v295 = vrot.slane %v205, %v294
        %v296 = vlaneseq
        %v297 = vshrl.u32 %v296, 7
        %v298 = vsub.s32 1, %v297
        %v299 = vrot.slane %v206, %v298
        %v300 = vlaneseq
        %v301 = vshrl.u32 %v300, 7
        %v302 = vsub.s32 1, %v301
        %v303 = vrot.slane %v207, %v302
        %v304 = vmul.f32 %v275, %v210
        %v305 = vmul.f32 %v275, %v211
        %v306 = vmul.f32 %v279, %v210
        %v307 = vmul.f32 %v279, %v211
        %v308 = vmul.f32 %v283, %v210
        %v309 = vmul.f32 %v283, %v211
        %v310 = vmul.f32 %v287, %v210
        %v311 = vmul.f32 %v287, %v211
        %v312 = vmul.f32 %v291, %v210
        %v313 = vmul.f32 %v291, %v211
        %v314 = vmul.f32 %v295, %v210
        %v315 = vmul.f32 %v295, %v211
        %v316 = vmul.f32 %v299, %v210
        %v317 = vmul.f32 %v299, %v211
        %v318 = vmul.f32 %v303, %v210
        %v319 = vmul.f32 %v303, %v211
        %v320 = vadd.f32 %v256, %v304
        %v321 = vadd.f32 %v257, %v305
        %v322 = vadd.f32 %v258, %v306
        %v323 = vadd.f32 %v259, %v307
        %v324 = vadd.f32 %v260, %v308
        %v325 = vadd.f32 %v261, %v309
        %v326 = vadd.f32 %v262, %v310
        %v327 = vadd.f32 %v263, %v311
        %v328 = vadd.f32 %v264, %v312
        %v329 = vadd.f32 %v265, %v313
        %v330 = vadd.f32 %v266, %v314
        %v331 = vadd.f32 %v267, %v315
        %v332 = vadd.f32 %v268, %v316
        %v333 = vadd.f32 %v269, %v317
        %v334 = vadd.f32 %v270, %v318
        %v335 = vadd.f32 %v271, %v319
        %v336 = vlaneseq
        %v337 = vshrl.u32 %v336, 7
        %v338 = vsub.s32 2, %v337
        %v339 = vrot.slane %v200, %v338
        %v340 = vlaneseq
        %v341 = vshrl.u32 %v340, 7
        %v342 = vsub.s32 2, %v341
        %v343 = vrot.slane %v201, %v342
        %v344 = vlaneseq
        %v345 = vshrl.u32 %v344, 7
        %v346 = vsub.s32 2, %v345
        %v347 = vrot.slane %v202, %v346
        %v348 = vlaneseq
        %v349 = vshrl.u32 %v348, 7
        %v350 = vsub.s32 2, %v349
        %v351 = vrot.slane %v203, %v350
        %v352 = vlaneseq
        %v353 = vshrl.u32 %v352, 7
        %v354 = vsub.s32 2, %v353
        %v355 = vrot.slane %v204, %v354
        %v356 = vlaneseq
        %v357 = vshrl.u32 %v356, 7
        %v358 = vsub.s32 2, %v357
        %v359 = vrot.slane %v205, %v358
        %v360 = vlaneseq
        %v361 = vshrl.u32 %v360, 7
        %v362 = vsub.s32 2, %v361
        %v363 = vrot.slane %v206, %v362
        %v364 = vlaneseq
        %v365 = vshrl.u32 %v364, 7
        %v366 = vsub.s32 2, %v365
        %v367 = vrot.slane %v207, %v366
        %v368 = vmul.f32 %v339, %v212
        %v369 = vmul.f32 %v339, %v213
        %v370 = vmul.f32 %v343, %v212
        %v371 = vmul.f32 %v343, %v213
        %v372 = vmul.f32 %v347, %v212
        %v373 = vmul.f32 %v347, %v213
        %v374 = vmul.f32 %v351, %v212
        %v375 = vmul.f32 %v351, %v213
        %v376 = vmul.f32 %v355, %v212
        %v377 = vmul.f32 %v355, %v213
        %v378 = vmul.f32 %v359, %v212
        %v379 = vmul.f32 %v359, %v213
        %v380 = vmul.f32 %v363, %v212
        %v381 = vmul.f32 %v363, %v213
        %v382 = vmul.f32 %v367, %v212
        %v383 = vmul.f32 %v367, %v213
        %v384 = vadd.f32 %v320, %v368
        %v385 = vadd.f32 %v321, %v369
        %v386 = vadd.f32 %v322, %v370
        %v387 = vadd.f32 %v323, %v371
        %v388 = vadd.f32 %v324, %v372
        %v389 = vadd.f32 %v325, %v373
        %v390 = vadd.f32 %v326, %v374
        %v391 = vadd.f32 %v327, %v375
        %v392 = vadd.f32 %v328, %v376
        %v393 = vadd.f32 %v329, %v377
        %v394 = vadd.f32 %v330, %v378
        %v395 = vadd.f32 %v331, %v379
        %v396 = vadd.f32 %v332, %v380
        %v397 = vadd.f32 %v333, %v381
        %v398 = vadd.f32 %v334, %v382
        %v399 = vadd.f32 %v335, %v383
        %v400 = vlaneseq
        %v401 = vshrl.u32 %v400, 7
        %v402 = vsub.s32 3, %v401
        %v403 = vrot.slane %v200, %v402
        %v404 = vlaneseq
        %v405 = vshrl.u32 %v404, 7
        %v406 = vsub.s32 3, %v405
        %v407 = vrot.slane %v201, %v406
        %v408 = vlaneseq
        %v409 = vshrl.u32 %v408, 7
        %v410 = vsub.s32 3, %v409
        %v411 = vrot.slane %v202, %v410
        %v412 = vlaneseq
        %v413 = vshrl.u32 %v412, 7
        %v414 = vsub.s32 3, %v413
        %v415 = vrot.slane %v203, %v414
        %v416 = vlaneseq
        %v417 = vshrl.u32 %v416, 7
        %v418 = vsub.s32 3, %v417
        %v419 = vrot.slane %v204, %v418
        %v420 = vlaneseq
        %v421 = vshrl.u32 %v420, 7
        %v422 = vsub.s32 3, %v421
        %v423 = vrot.slane %v205, %v422
        %v424 = vlaneseq
        %v425 = vshrl.u32 %v424, 7
        %v426 = vsub.s32 3, %v425
        %v427 = vrot.slane %v206, %v426
        %v428 = vlaneseq
        %v429 = vshrl.u32 %v428, 7
        %v430 = vsub.s32 3, %v429
        %v431 = vrot.slane %v207, %v430
        %v432 = vmul.f32 %v403, %v214
        %v433 = vmul.f32 %v403, %v215
        %v434 = vmul.f32 %v407, %v214
        %v435 = vmul.f32 %v407, %v215
        %v436 = vmul.f32 %v411, %v214
        %v437 = vmul.f32 %v411, %v215
        %v438 = vmul.f32 %v415, %v214
        %v439 = vmul.f32 %v415, %v215
        %v440 = vmul.f32 %v419, %v214
        %v441 = vmul.f32 %v419, %v215
        %v442 = vmul.f32 %v423, %v214
        %v443 = vmul.f32 %v423, %v215
        %v444 = vmul.f32 %v427, %v214
        %v445 = vmul.f32 %v427, %v215
        %v446 = vmul.f32 %v431, %v214
        %v447 = vmul.f32 %v431, %v215
        %v448 = vadd.f32 %v384, %v432
        %v449 = vadd.f32 %v385, %v433
        %v450 = vadd.f32 %v386, %v434
        %v451 = vadd.f32 %v387, %v435
        %v452 = vadd.f32 %v388, %v436
        %v453 = vadd.f32 %v389, %v437
        %v454 = vadd.f32 %v390, %v438
        %v455 = vadd.f32 %v391, %v439
        %v456 = vadd.f32 %v392, %v440
        %v457 = vadd.f32 %v393, %v441
        %v458 = vadd.f32 %v394, %v442
        %v459 = vadd.f32 %v395, %v443
        %v460 = vadd.f32 %v396, %v444
        %v461 = vadd.f32 %v397, %v445
        %v462 = vadd.f32 %v398, %v446
        %v463 = vadd.f32 %v399, %v447
        %v464 = vlaneseq
        %v465 = vshrl.u32 %v464, 7
        %v466 = vsub.s32 4, %v465
        %v467 = vrot.slane %v200, %v466
        %v468 = vlaneseq
        %v469 = vshrl.u32 %v468, 7
        %v470 = vsub.s32 4, %v469
        %v471 = vrot.slane %v201, %v470
        %v472 = vlaneseq
        %v473 = vshrl.u32 %v472, 7
        %v474 = vsub.s32 4, %v473
        %v475 = vrot.slane %v202, %v474
        %v476 = vlaneseq
        %v477 = vshrl.u32 %v476, 7
        %v478 = vsub.s32 4, %v477
        %v479 = vrot.slane %v203, %v478
        %v480 = vlaneseq
        %v481 = vshrl.u32 %v480, 7
        %v482 = vsub.s32 4, %v481
        %v483 = vrot.slane %v204, %v482
        %v484 = vlaneseq
        %v485 = vshrl.u32 %v484, 7
        %v486 = vsub.s32 4, %v485
        %v487 = vrot.slane %v205, %v486
        %v488 = vlaneseq
        %v489 = vshrl.u32 %v488, 7
        %v490 = vsub.s32 4, %v489
        %v491 = vrot.slane %v206, %v490
        %v492 = vlaneseq
        %v493 = vshrl.u32 %v492, 7
        %v494 = vsub.s32 4, %v493
        %v495 = vrot.slane %v207, %v494
        %v496 = vmul.f32 %v467, %v216
        %v497 = vmul.f32 %v467, %v217
        %v498 = vmul.f32 %v471, %v216
        %v499 = vmul.f32 %v471, %v217
        %v500 = vmul.f32 %v475, %v216
        %v501 = vmul.f32 %v475, %v217
        %v502 = vmul.f32 %v479, %v216
        %v503 = vmul.f32 %v479, %v217
        %v504 = vmul.f32 %v483, %v216
        %v505 = vmul.f32 %v483, %v217
        %v506 = vmul.f32 %v487, %v216
        %v507 = vmul.f32 %v487, %v217
        %v508 = vmul.f32 %v491, %v216
        %v509 = vmul.f32 %v491, %v217
        %v510 = vmul.f32 %v495, %v216
        %v511 = vmul.f32 %v495, %v217
        %v512 = vadd.f32 %v448, %v496
        %v513 = vadd.f32 %v449, %v497
        %v514 = vadd.f32 %v450, %v498
        %v515 = vadd.f32 %v451, %v499
        %v516 = vadd.f32 %v452, %v500
        %v517 = vadd.f32 %v453, %v501
        %v518 = vadd.f32 %v454, %v502
        %v519 = vadd.f32 %v455, %v503
        %v520 = vadd.f32 %v456, %v504
        %v521 = vadd.f32 %v457, %v505
        %v522 = vadd.f32 %v458, %v506
        %v523 = vadd.f32 %v459, %v507
        %v524 = vadd.f32 %v460, %v508
        %v525 = vadd.f32 %v461, %v509
        %v526 = vadd.f32 %v462, %v510
        %v527 = vadd.f32 %v463, %v511
        %v528 = vlaneseq
        %v529 = vshrl.u32 %v528, 7
        %v530 = vsub.s32 5, %v529
        %v531 = vrot.slane %v200, %v530
        %v532 = vlaneseq
        %v533 = vshrl.u32 %v532, 7
        %v534 = vsub.s32 5, %v533
        %v535 = vrot.slane %v201, %v534
        %v536 = vlaneseq
        %v537 = vshrl.u32 %v536, 7
        %v538 = vsub.s32 5, %v537
        %v539 = vrot.slane %v202, %v538
        %v540 = vlaneseq
        %v541 = vshrl.u32 %v540, 7
        %v542 = vsub.s32 5, %v541
        %v543 = vrot.slane %v203, %v542
        %v544 = vlaneseq
        %v545 = vshrl.u32 %v544, 7
        %v546 = vsub.s32 5, %v545
        %v547 = vrot.slane %v204, %v546
        %v548 = vlaneseq
        %v549 = vshrl.u32 %v548, 7
        %v550 = vsub.s32 5, %v549
        %v551 = vrot.slane %v205, %v550
        %v552 = vlaneseq
        %v553 = vshrl.u32 %v552, 7
        %v554 = vsub.s32 5, %v553
        %v555 = vrot.slane %v206, %v554
        %v556 = vlaneseq
        %v557 = vshrl.u32 %v556, 7
        %v558 = vsub.s32 5, %v557
        %v559 = vrot.slane %v207, %v558
        %v560 = vmul.f32 %v531, %v218
        %v561 = vmul.f32 %v531, %v219
        %v562 = vmul.f32 %v535, %v218
        %v563 = vmul.f32 %v535, %v219
        %v564 = vmul.f32 %v539, %v218
        %v565 = vmul.f32 %v539, %v219
        %v566 = vmul.f32 %v543, %v218
        %v567 = vmul.f32 %v543, %v219
        %v568 = vmul.f32 %v547, %v218
        %v569 = vmul.f32 %v547, %v219
        %v570 = vmul.f32 %v551, %v218
        %v571 = vmul.f32 %v551, %v219
        %v572 = vmul.f32 %v555, %v218
        %v573 = vmul.f32 %v555, %v219
        %v574 = vmul.f32 %v559, %v218
        %v575 = vmul.f32 %v559, %v219
        %v576 = vadd.f32 %v512, %v560
        %v577 = vadd.f32 %v513, %v561
        %v578 = vadd.f32 %v514, %v562
        %v579 = vadd.f32 %v515, %v563
        %v580 = vadd.f32 %v516, %v564
        %v581 = vadd.f32 %v517, %v565
        %v582 = vadd.f32 %v518, %v566
        %v583 = vadd.f32 %v519, %v567
        %v584 = vadd.f32 %v520, %v568
        %v585 = vadd.f32 %v521, %v569
        %v586 = vadd.f32 %v522, %v570
        %v587 = vadd.f32 %v523, %v571
        %v588 = vadd.f32 %v524, %v572
        %v589 = vadd.f32 %v525, %v573
        %v590 = vadd.f32 %v526, %v574
        %v591 = vadd.f32 %v527, %v575
        %v592 = vlaneseq
        %v593 = vshrl.u32 %v592, 7
        %v594 = vsub.s32 6, %v593
        %v595 = vrot.slane %v200, %v594
        %v596 = vlaneseq
        %v597 = vshrl.u32 %v596, 7
        %v598 = vsub.s32 6, %v597
        %v599 = vrot.slane %v201, %v598
        %v600 = vlaneseq
        %v601 = vshrl.u32 %v600, 7
        %v602 = vsub.s32 6, %v601
        %v603 = vrot.slane %v202, %v602
        %v604 = vlaneseq
        %v605 = vshrl.u32 %v604, 7
        %v606 = vsub.s32 6, %v605
        %v607 = vrot.slane %v203, %v606
        %v608 = vlaneseq
        %v609 = vshrl.u32 %v608, 7
        %v610 = vsub.s32 6, %v609
        %v611 = vrot.slane %v204, %v610
        %v612 = vlaneseq
        %v613 = vshrl.u32 %v612, 7
        %v614 = vsub.s32 6, %v613
        %v615 = vrot.slane %v205, %v614
        %v616 = vlaneseq
        %v617 = vshrl.u32 %v616, 7
        %v618 = vsub.s32 6, %v617
        %v619 = vrot.slane %v206, %v618
        %v620 = vlaneseq
        %v621 = vshrl.u32 %v620, 7
        %v622 = vsub.s32 6, %v621
        %v623 = vrot.slane %v207, %v622
        %v624 = vmul.f32 %v595, %v220
        %v625 = vmul.f32 %v595, %v221
        %v626 = vmul.f32 %v599, %v220
        %v627 = vmul.f32 %v599, %v221
        %v628 = vmul.f32 %v603, %v220
        %v629 = vmul.f32 %v603, %v221
        %v630 = vmul.f32 %v607, %v220
        %v631 = vmul.f32 %v607, %v221
        %v632 = vmul.f32 %v611, %v220
        %v633 = vmul.f32 %v611, %v221
        %v634 = vmul.f32 %v615, %v220
        %v635 = vmul.f32 %v615, %v221
        %v636 = vmul.f32 %v619, %v220
        %v637 = vmul.f32 %v619, %v221
        %v638 = vmul.f32 %v623, %v220
        %v639 = vmul.f32 %v623, %v221
        %v640 = vadd.f32 %v576, %v624
        %v641 = vadd.f32 %v577, %v625
        %v642 = vadd.f32 %v578, %v626
        %v643 = vadd.f32 %v579, %v627
        %v644 = vadd.f32 %v580, %v628
        %v645 = vadd.f32 %v581, %v629
        %v646 = vadd.f32 %v582, %v630
        %v647 = vadd.f32 %v583, %v631
        %v648 = vadd.f32 %v584, %v632
        %v649 = vadd.f32 %v585, %v633
        %v650 = vadd.f32 %v586, %v634
        %v651 = vadd.f32 %v587, %v635
        %v652 = vadd.f32 %v588, %v636
        %v653 = vadd.f32 %v589, %v637
        %v654 = vadd.f32 %v590, %v638
        %v655 = vadd.f32 %v591, %v639
        %v656 = vlaneseq
        %v657 = vshrl.u32 %v656, 7
        %v658 = vsub.s32 7, %v657
        %v659 = vrot.slane %v200, %v658
        %v660 = vlaneseq
        %v661 = vshrl.u32 %v660, 7
        %v662 = vsub.s32 7, %v661
        %v663 = vrot.slane %v201, %v662
        %v664 = vlaneseq
        %v665 = vshrl.u32 %v664, 7
        %v666 = vsub.s32 7, %v665
        %v667 = vrot.slane %v202, %v666
        %v668 = vlaneseq
        %v669 = vshrl.u32 %v668, 7
        %v670 = vsub.s32 7, %v669
        %v671 = vrot.slane %v203, %v670
        %v672 = vlaneseq
        %v673 = vshrl.u32 %v672, 7
        %v674 = vsub.s32 7, %v673
        %v675 = vrot.slane %v204, %v674
        %v676 = vlaneseq
        %v677 = vshrl.u32 %v676, 7
        %v678 = vsub.s32 7, %v677
        %v679 = vrot.slane %v205, %v678
        %v680 = vlaneseq
        %v681 = vshrl.u32 %v680, 7
        %v682 = vsub.s32 7, %v681
        %v683 = vrot.slane %v206, %v682
        %v684 = vlaneseq
        %v685 = vshrl.u32 %v684, 7
        %v686 = vsub.s32 7, %v685
        %v687 = vrot.slane %v207, %v686
        %v688 = vmul.f32 %v659, %v222
        %v689 = vmul.f32 %v659, %v223
        %v690 = vmul.f32 %v663, %v222
        %v691 = vmul.f32 %v663, %v223
        %v692 = vmul.f32 %v667, %v222
        %v693 = vmul.f32 %v667, %v223
        %v694 = vmul.f32 %v671, %v222
        %v695 = vmul.f32 %v671, %v223
        %v696 = vmul.f32 %v675, %v222
        %v697 = vmul.f32 %v675, %v223
        %v698 = vmul.f32 %v679, %v222
        %v699 = vmul.f32 %v679, %v223
        %v700 = vmul.f32 %v683, %v222
        %v701 = vmul.f32 %v683, %v223
        %v702 = vmul.f32 %v687, %v222
        %v703 = vmul.f32 %v687, %v223
        %v704 = vadd.f32 %v640, %v688
        %v705 = vadd.f32 %v641, %v689
        %v706 = vadd.f32 %v642, %v690
        %v707 = vadd.f32 %v643, %v691
        %v708 = vadd.f32 %v644, %v692
        %v709 = vadd.f32 %v645, %v693
        %v710 = vadd.f32 %v646, %v694
        %v711 = vadd.f32 %v647, %v695
        %v712 = vadd.f32 %v648, %v696
        %v713 = vadd.f32 %v649, %v697
        %v714 = vadd.f32 %v650, %v698
        %v715 = vadd.f32 %v651, %v699
        %v716 = vadd.f32 %v652, %v700
        %v717 = vadd.f32 %v653, %v701
        %v718 = vadd.f32 %v654, %v702
        %v719 = vadd.f32 %v655, %v703
        %vm720 = vcmask 261120
        %721 = vst.msk [vmem:[#allocation2] sm:$0xff] %vm720, %v704
        %722 = vst.msk [vmem:[#allocation2 + $0x8] sm:$0xff] %vm720, %v705
        %723 = vst.msk [vmem:[#allocation2 + $0x10] sm:$0xff] %vm720, %v706
        %724 = vst.msk [vmem:[#allocation2 + $0x18] sm:$0xff] %vm720, %v707
        %725 = vst.msk [vmem:[#allocation2 + $0x20] sm:$0xff] %vm720, %v708
        %726 = vst.msk [vmem:[#allocation2 + $0x28] sm:$0xff] %vm720, %v709
        %727 = vst.msk [vmem:[#allocation2 + $0x30] sm:$0xff] %vm720, %v710
        %728 = vst.msk [vmem:[#allocation2 + $0x38] sm:$0xff] %vm720, %v711
        %729 = vst.msk [vmem:[#allocation2 + $0x40] sm:$0xff] %vm720, %v712
        %730 = vst.msk [vmem:[#allocation2 + $0x48] sm:$0xff] %vm720, %v713
        %731 = vst.msk [vmem:[#allocation2 + $0x50] sm:$0xff] %vm720, %v714
        %732 = vst.msk [vmem:[#allocation2 + $0x58] sm:$0xff] %vm720, %v715
        %733 = vst.msk [vmem:[#allocation2 + $0x60] sm:$0xff] %vm720, %v716
        %734 = vst.msk [vmem:[#allocation2 + $0x68] sm:$0xff] %vm720, %v717
        %735 = vst.msk [vmem:[#allocation2 + $0x70] sm:$0xff] %vm720, %v718
        %736 = vst.msk [vmem:[#allocation2 + $0x78] sm:$0xff] %vm720, %v719
        %v737 = vld [vmem:[#allocation2] sm:$0xff]
        %v738 = vld [vmem:[#allocation2 + $0x8] sm:$0xff]
        %v739 = vld [vmem:[#allocation2 + $0x10] sm:$0xff]
        %v740 = vld [vmem:[#allocation2 + $0x18] sm:$0xff]
        %v741 = vld [vmem:[#allocation2 + $0x20] sm:$0xff]
        %v742 = vld [vmem:[#allocation2 + $0x28] sm:$0xff]
        %v743 = vld [vmem:[#allocation2 + $0x30] sm:$0xff]
        %v744 = vld [vmem:[#allocation2 + $0x38] sm:$0xff]
        %v745 = vld [vmem:[#allocation2 + $0x40] sm:$0xff]
        %v746 = vld [vmem:[#allocation2 + $0x48] sm:$0xff]
        %v747 = vld [vmem:[#allocation2 + $0x50] sm:$0xff]
        %v748 = vld [vmem:[#allocation2 + $0x58] sm:$0xff]
        %v749 = vld [vmem:[#allocation2 + $0x60] sm:$0xff]
        %v750 = vld [vmem:[#allocation2 + $0x68] sm:$0xff]
        %v751 = vld [vmem:[#allocation2 + $0x70] sm:$0xff]
        %v752 = vld [vmem:[#allocation2 + $0x78] sm:$0xff]
        %v753 = vsel %vm720, %v737, 0.0
        %754 = vadd.xlane.f32.xlu0 %v753
        %v755 = vpop.xlane.xlu0 %754
        %v756 = vsel %vm720, %v738, 0.0
        %757 = vadd.xlane.f32.xlu0 %v756
        %v758 = vpop.xlane.xlu0 %757
        %v759 = vsel %vm720, %v739, 0.0
        %760 = vadd.xlane.f32.xlu0 %v759
        %v761 = vpop.xlane.xlu0 %760
        %v762 = vsel %vm720, %v740, 0.0
        %763 = vadd.xlane.f32.xlu0 %v762
        %v764 = vpop.xlane.xlu0 %763
        %v765 = vsel %vm720, %v741, 0.0
        %766 = vadd.xlane.f32.xlu0 %v765
        %v767 = vpop.xlane.xlu0 %766
        %v768 = vsel %vm720, %v742, 0.0
        %769 = vadd.xlane.f32.xlu0 %v768
        %v770 = vpop.xlane.xlu0 %769
        %v771 = vsel %vm720, %v743, 0.0
        %772 = vadd.xlane.f32.xlu0 %v771
        %v773 = vpop.xlane.xlu0 %772
        %v774 = vsel %vm720, %v744, 0.0
        %775 = vadd.xlane.f32.xlu0 %v774
        %v776 = vpop.xlane.xlu0 %775
        %v777 = vsel %vm720, %v745, 0.0
        %778 = vadd.xlane.f32.xlu0 %v777
        %v779 = vpop.xlane.xlu0 %778
        %v780 = vsel %vm720, %v746, 0.0
        %781 = vadd.xlane.f32.xlu0 %v780
        %v782 = vpop.xlane.xlu0 %781
        %v783 = vsel %vm720, %v747, 0.0
        %784 = vadd.xlane.f32.xlu0 %v783
        %v785 = vpop.xlane.xlu0 %784
        %v786 = vsel %vm720, %v748, 0.0
        %787 = vadd.xlane.f32.xlu0 %v786
        %v788 = vpop.xlane.xlu0 %787
        %v789 = vsel %vm720, %v749, 0.0
        %790 = vadd.xlane.f32.xlu0 %v789
        %v791 = vpop.xlane.xlu0 %790
        %v792 = vsel %vm720, %v750, 0.0
        %793 = vadd.xlane.f32.xlu0 %v792
        %v794 = vpop.xlane.xlu0 %793
        %v795 = vsel %vm720, %v751, 0.0
        %796 = vadd.xlane.f32.xlu0 %v795
        %v797 = vpop.xlane.xlu0 %796
        %v798 = vsel %vm720, %v752, 0.0
        %799 = vadd.xlane.f32.xlu0 %v798
        %v800 = vpop.xlane.xlu0 %799
        %v801 = vmul.f32 %v755, 0.03125
        %v802 = vmul.f32 %v758, 0.03125
        %v803 = vmul.f32 %v761, 0.03125
        %v804 = vmul.f32 %v764, 0.03125
        %v805 = vmul.f32 %v767, 0.03125
        %v806 = vmul.f32 %v770, 0.03125
        %v807 = vmul.f32 %v773, 0.03125
        %v808 = vmul.f32 %v776, 0.03125
        %v809 = vmul.f32 %v779, 0.03125
        %v810 = vmul.f32 %v782, 0.03125
        %v811 = vmul.f32 %v785, 0.03125
        %v812 = vmul.f32 %v788, 0.03125
        %v813 = vmul.f32 %v791, 0.03125
        %v814 = vmul.f32 %v794, 0.03125
        %v815 = vmul.f32 %v797, 0.03125
        %v816 = vmul.f32 %v800, 0.03125
        %v817 = vmul.f32 %v801, %v801
        %v818 = vmul.f32 %v802, %v802
        %v819 = vmul.f32 %v803, %v803
        %v820 = vmul.f32 %v804, %v804
        %v821 = vmul.f32 %v805, %v805
        %v822 = vmul.f32 %v806, %v806
        %v823 = vmul.f32 %v807, %v807
        %v824 = vmul.f32 %v808, %v808
        %v825 = vmul.f32 %v809, %v809
        %v826 = vmul.f32 %v810, %v810
        %v827 = vmul.f32 %v811, %v811
        %v828 = vmul.f32 %v812, %v812
        %v829 = vmul.f32 %v813, %v813
        %v830 = vmul.f32 %v814, %v814
        %v831 = vmul.f32 %v815, %v815
        %v832 = vmul.f32 %v816, %v816
        %v849 = vlaneseq
        %v850 = vand.u32 %v849, 127
        %v851 = vlaneseq
        %v852 = vshrl.u32 %v851, 7
        %v853 = vsub.s32 %v850, %v852
        %v854 = vrot.slane %v817, %v853
        %v855 = vadd.s32 %v850, 4294967288
        %v856 = vlaneseq
        %v857 = vshrl.u32 %v856, 7
        %v858 = vsub.s32 %v855, %v857
        %v859 = vrot.slane %v818, %v858
        %vm860 = vcmask 130112
        %v861 = vsel %vm860, %v859, %v854
        %v862 = vlaneseq
        %v863 = vshrl.u32 %v862, 7
        %v864 = vsub.s32 %v850, %v863
        %v865 = vrot.slane %v819, %v864
        %v866 = vlaneseq
        %v867 = vshrl.u32 %v866, 7
        %v868 = vsub.s32 %v855, %v867
        %v869 = vrot.slane %v820, %v868
        %v870 = vsel %vm860, %v869, %v865
        %v871 = vlaneseq
        %v872 = vshrl.u32 %v871, 7
        %v873 = vsub.s32 %v850, %v872
        %v874 = vrot.slane %v821, %v873
        %v875 = vlaneseq
        %v876 = vshrl.u32 %v875, 7
        %v877 = vsub.s32 %v855, %v876
        %v878 = vrot.slane %v822, %v877
        %v879 = vsel %vm860, %v878, %v874
        %v880 = vlaneseq
        %v881 = vshrl.u32 %v880, 7
        %v882 = vsub.s32 %v850, %v881
        %v883 = vrot.slane %v823, %v882
        %v884 = vlaneseq
        %v885 = vshrl.u32 %v884, 7
        %v886 = vsub.s32 %v855, %v885
        %v887 = vrot.slane %v824, %v886
        %v888 = vsel %vm860, %v887, %v883
        %v889 = vlaneseq
        %v890 = vshrl.u32 %v889, 7
        %v891 = vsub.s32 %v850, %v890
        %v892 = vrot.slane %v825, %v891
        %v893 = vlaneseq
        %v894 = vshrl.u32 %v893, 7
        %v895 = vsub.s32 %v855, %v894
        %v896 = vrot.slane %v826, %v895
        %v897 = vsel %vm860, %v896, %v892
        %v898 = vlaneseq
        %v899 = vshrl.u32 %v898, 7
        %v900 = vsub.s32 %v850, %v899
        %v901 = vrot.slane %v827, %v900
        %v902 = vlaneseq
        %v903 = vshrl.u32 %v902, 7
        %v904 = vsub.s32 %v855, %v903
        %v905 = vrot.slane %v828, %v904
        %v906 = vsel %vm860, %v905, %v901
        %v907 = vlaneseq
        %v908 = vshrl.u32 %v907, 7
        %v909 = vsub.s32 %v850, %v908
        %v910 = vrot.slane %v829, %v909
        %v911 = vlaneseq
        %v912 = vshrl.u32 %v911, 7
        %v913 = vsub.s32 %v855, %v912
        %v914 = vrot.slane %v830, %v913
        %v915 = vsel %vm860, %v914, %v910
        %v916 = vlaneseq
        %v917 = vshrl.u32 %v916, 7
        %v918 = vsub.s32 %v850, %v917
        %v919 = vrot.slane %v831, %v918
        %v920 = vlaneseq
        %v921 = vshrl.u32 %v920, 7
        %v922 = vsub.s32 %v855, %v921
        %v923 = vrot.slane %v832, %v922
        %v924 = vsel %vm860, %v923, %v919
        %vm925 = vcmask 1041409
        %v926 = vsel %vm925, %v870, %v861
        %vm927 = vcmask 1042434
        %v928 = vsel %vm927, %v879, %v926
        %vm929 = vcmask 1043459
        %v930 = vsel %vm929, %v888, %v928
        %vm931 = vcmask 1044484
        %v932 = vsel %vm931, %v897, %v930
        %vm933 = vcmask 1045509
        %v934 = vsel %vm933, %v906, %v932
        %vm935 = vcmask 1046534
        %v936 = vsel %vm935, %v915, %v934
        %vm937 = vcmask 1047559
        %v938 = vsel %vm937, %v924, %v936
        %vm940 = vcmask 130048
        %v941 = vsel %vm940, %v938, 0.0
        %942 = vadd.xlane.f32.xlu0 %v941
        %v943 = vpop.xlane.xlu0 %942
        %v944 = vrsqrt.pop %v943
        %v945 = vmul.f32 %v943, %v944
        %vm946 = vcmp.eq.f32.partialorder %v943, inf
        %v947 = vsel %vm946, %v943, %v945
        %vm948 = vcmp.eq.f32.partialorder %v943, 0.0
        %v949 = vand.u32 %v943, 2147483648
        %v950 = vsel %vm948, %v949, %v947
        %v951 = vadd.f32 %v943, 1.0
        %v952 = vrcp.pop %v951
        %v953 = vmul.f32 %v951, %v952
        %v954 = vsub.f32 2.0, %v953
        %v955 = vmul.f32 %v952, %v954
        %v956 = vmul.f32 %v950, %v955
        %v958 = vlaneseq
        %v959 = vshrl.u32 %v958, 7
        %v960 = vsub.s32 0, %v959
        %v961 = vrot.slane %v956, %v960
        %v962 = vlaneseq
        %v963 = vshrl.u32 %v962, 7
        %v964 = vsub.s32 1, %v963
        %v965 = vrot.slane %v956, %v964
        %v966 = vlaneseq
        %v967 = vshrl.u32 %v966, 7
        %v968 = vsub.s32 2, %v967
        %v969 = vrot.slane %v956, %v968
        %v970 = vlaneseq
        %v971 = vshrl.u32 %v970, 7
        %v972 = vsub.s32 3, %v971
        %v973 = vrot.slane %v956, %v972
        %v974 = vlaneseq
        %v975 = vshrl.u32 %v974, 7
        %v976 = vsub.s32 4, %v975
        %v977 = vrot.slane %v956, %v976
        %v978 = vlaneseq
        %v979 = vshrl.u32 %v978, 7
        %v980 = vsub.s32 5, %v979
        %v981 = vrot.slane %v956, %v980
        %v982 = vlaneseq
        %v983 = vshrl.u32 %v982, 7
        %v984 = vsub.s32 6, %v983
        %v985 = vrot.slane %v956, %v984
        %v986 = vlaneseq
        %v987 = vshrl.u32 %v986, 7
        %v988 = vsub.s32 7, %v987
        %v989 = vrot.slane %v956, %v988
        %v998 = vmul.f32 %v801, %v961
        %v999 = vmul.f32 %v802, %v961
        %v1000 = vmul.f32 %v803, %v965
        %v1001 = vmul.f32 %v804, %v965
        %v1002 = vmul.f32 %v805, %v969
        %v1003 = vmul.f32 %v806, %v969
        %v1004 = vmul.f32 %v807, %v973
        %v1005 = vmul.f32 %v808, %v973
        %v1006 = vmul.f32 %v809, %v977
        %v1007 = vmul.f32 %v810, %v977
        %v1008 = vmul.f32 %v811, %v981
        %v1009 = vmul.f32 %v812, %v981
        %v1010 = vmul.f32 %v813, %v985
        %v1011 = vmul.f32 %v814, %v985
        %v1012 = vmul.f32 %v815, %v989
        %v1013 = vmul.f32 %v816, %v989
        %1015 = vset.pattern.permute.xlu0 0
        %1016 = vperm.xlu0 %1015, %v998
        %v1017 = vpop.permute.xlu0 %1016
        %1020 = vset.pattern.permute.xlu0 0
        %1021 = vperm.xlu0 %1020, %v999
        %v1022 = vpop.permute.xlu0 %1021
        %1025 = vset.pattern.permute.xlu0 0
        %1026 = vperm.xlu0 %1025, %v1000
        %v1027 = vpop.permute.xlu0 %1026
        %1030 = vset.pattern.permute.xlu0 0
        %1031 = vperm.xlu0 %1030, %v1001
        %v1032 = vpop.permute.xlu0 %1031
        %1035 = vset.pattern.permute.xlu0 0
        %1036 = vperm.xlu0 %1035, %v1002
        %v1037 = vpop.permute.xlu0 %1036
        %1040 = vset.pattern.permute.xlu0 0
        %1041 = vperm.xlu0 %1040, %v1003
        %v1042 = vpop.permute.xlu0 %1041
        %1045 = vset.pattern.permute.xlu0 0
        %1046 = vperm.xlu0 %1045, %v1004
        %v1047 = vpop.permute.xlu0 %1046
        %1050 = vset.pattern.permute.xlu0 0
        %1051 = vperm.xlu0 %1050, %v1005
        %v1052 = vpop.permute.xlu0 %1051
        %1055 = vset.pattern.permute.xlu0 0
        %1056 = vperm.xlu0 %1055, %v1006
        %v1057 = vpop.permute.xlu0 %1056
        %1060 = vset.pattern.permute.xlu0 0
        %1061 = vperm.xlu0 %1060, %v1007
        %v1062 = vpop.permute.xlu0 %1061
        %1065 = vset.pattern.permute.xlu0 0
        %1066 = vperm.xlu0 %1065, %v1008
        %v1067 = vpop.permute.xlu0 %1066
        %1070 = vset.pattern.permute.xlu0 0
        %1071 = vperm.xlu0 %1070, %v1009
        %v1072 = vpop.permute.xlu0 %1071
        %1075 = vset.pattern.permute.xlu0 0
        %1076 = vperm.xlu0 %1075, %v1010
        %v1077 = vpop.permute.xlu0 %1076
        %1080 = vset.pattern.permute.xlu0 0
        %1081 = vperm.xlu0 %1080, %v1011
        %v1082 = vpop.permute.xlu0 %1081
        %1085 = vset.pattern.permute.xlu0 0
        %1086 = vperm.xlu0 %1085, %v1012
        %v1087 = vpop.permute.xlu0 %1086
        %1090 = vset.pattern.permute.xlu0 0
        %1091 = vperm.xlu0 %1090, %v1013
        %v1092 = vpop.permute.xlu0 %1091
        %v1094 = vmul.f32 %v737, %v1017
        %v1095 = vmul.f32 %v738, %v1022
        %v1096 = vmul.f32 %v739, %v1027
        %v1097 = vmul.f32 %v740, %v1032
        %v1098 = vmul.f32 %v741, %v1037
        %v1099 = vmul.f32 %v742, %v1042
        %v1100 = vmul.f32 %v743, %v1047
        %v1101 = vmul.f32 %v744, %v1052
        %v1102 = vmul.f32 %v745, %v1057
        %v1103 = vmul.f32 %v746, %v1062
        %v1104 = vmul.f32 %v747, %v1067
        %v1105 = vmul.f32 %v748, %v1072
        %v1106 = vmul.f32 %v749, %v1077
        %v1107 = vmul.f32 %v750, %v1082
        %v1108 = vmul.f32 %v751, %v1087
        %v1109 = vmul.f32 %v752, %v1092
        %v1110 = vsel %vm720, %v1094, 0.0
        %v1111 = vsel %vm720, %v1095, 0.0
        %v1112 = vadd.f32 %v1110, %v1111
        %v1113 = vrot.slane %v1112, 4
        %v1114 = vadd.f32 %v1112, %v1113
        %v1115 = vrot.slane %v1114, 2
        %v1116 = vadd.f32 %v1114, %v1115
        %v1117 = vrot.slane %v1116, 1
        %v1118 = vadd.f32 %v1116, %v1117
        %v1119 = vsel %vm720, %v1096, 0.0
        %v1120 = vsel %vm720, %v1097, 0.0
        %v1121 = vadd.f32 %v1119, %v1120
        %v1122 = vrot.slane %v1121, 4
        %v1123 = vadd.f32 %v1121, %v1122
        %v1124 = vrot.slane %v1123, 2
        %v1125 = vadd.f32 %v1123, %v1124
        %v1126 = vrot.slane %v1125, 1
        %v1127 = vadd.f32 %v1125, %v1126
        %v1128 = vsel %vm720, %v1098, 0.0
        %v1129 = vsel %vm720, %v1099, 0.0
        %v1130 = vadd.f32 %v1128, %v1129
        %v1131 = vrot.slane %v1130, 4
        %v1132 = vadd.f32 %v1130, %v1131
        %v1133 = vrot.slane %v1132, 2
        %v1134 = vadd.f32 %v1132, %v1133
        %v1135 = vrot.slane %v1134, 1
        %v1136 = vadd.f32 %v1134, %v1135
        %v1137 = vsel %vm720, %v1100, 0.0
        %v1138 = vsel %vm720, %v1101, 0.0
        %v1139 = vadd.f32 %v1137, %v1138
        %v1140 = vrot.slane %v1139, 4
        %v1141 = vadd.f32 %v1139, %v1140
        %v1142 = vrot.slane %v1141, 2
        %v1143 = vadd.f32 %v1141, %v1142
        %v1144 = vrot.slane %v1143, 1
        %v1145 = vadd.f32 %v1143, %v1144
        %v1146 = vsel %vm720, %v1102, 0.0
        %v1147 = vsel %vm720, %v1103, 0.0
        %v1148 = vadd.f32 %v1146, %v1147
        %v1149 = vrot.slane %v1148, 4
        %v1150 = vadd.f32 %v1148, %v1149
        %v1151 = vrot.slane %v1150, 2
        %v1152 = vadd.f32 %v1150, %v1151
        %v1153 = vrot.slane %v1152, 1
        %v1154 = vadd.f32 %v1152, %v1153
        %v1155 = vsel %vm720, %v1104, 0.0
        %v1156 = vsel %vm720, %v1105, 0.0
        %v1157 = vadd.f32 %v1155, %v1156
        %v1158 = vrot.slane %v1157, 4
        %v1159 = vadd.f32 %v1157, %v1158
        %v1160 = vrot.slane %v1159, 2
        %v1161 = vadd.f32 %v1159, %v1160
        %v1162 = vrot.slane %v1161, 1
        %v1163 = vadd.f32 %v1161, %v1162
        %v1164 = vsel %vm720, %v1106, 0.0
        %v1165 = vsel %vm720, %v1107, 0.0
        %v1166 = vadd.f32 %v1164, %v1165
        %v1167 = vrot.slane %v1166, 4
        %v1168 = vadd.f32 %v1166, %v1167
        %v1169 = vrot.slane %v1168, 2
        %v1170 = vadd.f32 %v1168, %v1169
        %v1171 = vrot.slane %v1170, 1
        %v1172 = vadd.f32 %v1170, %v1171
        %v1173 = vsel %vm720, %v1108, 0.0
        %v1174 = vsel %vm720, %v1109, 0.0
        %v1175 = vadd.f32 %v1173, %v1174
        %v1176 = vrot.slane %v1175, 4
        %v1177 = vadd.f32 %v1175, %v1176
        %v1178 = vrot.slane %v1177, 2
        %v1179 = vadd.f32 %v1177, %v1178
        %v1180 = vrot.slane %v1179, 1
        %v1181 = vadd.f32 %v1179, %v1180
        %v1190 = vsel %vm925, %v1127, %v1118
        %v1191 = vsel %vm927, %v1136, %v1190
        %v1192 = vsel %vm929, %v1145, %v1191
        %v1193 = vsel %vm931, %v1154, %v1192
        %v1194 = vsel %vm933, %v1163, %v1193
        %v1195 = vsel %vm935, %v1172, %v1194
        %v1196 = vsel %vm937, %v1181, %v1195
        %v1198 = vsel %vm720, %v1196, -inf
        %1199 = vmax.xlane.f32.xlu0 %v1198
        %v1200 = vpop.xlane.xlu0 %1199
        %v1202 = vrot.slane %v1200, 1
        %v1203 = vrot.slane %v1200, 2
        %v1204 = vrot.slane %v1200, 3
        %v1205 = vrot.slane %v1200, 4
        %v1206 = vrot.slane %v1200, 5
        %v1207 = vrot.slane %v1200, 6
        %v1208 = vrot.slane %v1200, 7
        %v1217 = vsub.f32 %v1118, %v1200
        %v1218 = vsub.f32 %v1127, %v1202
        %v1219 = vsub.f32 %v1136, %v1203
        %v1220 = vsub.f32 %v1145, %v1204
        %v1221 = vsub.f32 %v1154, %v1205
        %v1222 = vsub.f32 %v1163, %v1206
        %v1223 = vsub.f32 %v1172, %v1207
        %v1224 = vsub.f32 %v1181, %v1208
        %v1225 = vmul.f32 %v1217, 1.442695
        %v1226 = vpow.pop %v1225
        %v1227 = vmul.f32 %v1218, 1.442695
        %v1228 = vpow.pop %v1227
        %v1229 = vmul.f32 %v1219, 1.442695
        %v1230 = vpow.pop %v1229
        %v1231 = vmul.f32 %v1220, 1.442695
        %v1232 = vpow.pop %v1231
        %v1233 = vmul.f32 %v1221, 1.442695
        %v1234 = vpow.pop %v1233
        %v1235 = vmul.f32 %v1222, 1.442695
        %v1236 = vpow.pop %v1235
        %v1237 = vmul.f32 %v1223, 1.442695
        %v1238 = vpow.pop %v1237
        %v1239 = vmul.f32 %v1224, 1.442695
        %v1240 = vpow.pop %v1239
        %v1249 = vrot.slane %v1228, 7
        %v1250 = vsel %vm925, %v1249, %v1226
        %v1251 = vrot.slane %v1230, 6
        %v1252 = vsel %vm927, %v1251, %v1250
        %v1253 = vrot.slane %v1232, 5
        %v1254 = vsel %vm929, %v1253, %v1252
        %v1255 = vrot.slane %v1234, 4
        %v1256 = vsel %vm931, %v1255, %v1254
        %v1257 = vrot.slane %v1236, 3
        %v1258 = vsel %vm933, %v1257, %v1256
        %v1259 = vrot.slane %v1238, 2
        %v1260 = vsel %vm935, %v1259, %v1258
        %v1261 = vrot.slane %v1240, 1
        %v1262 = vsel %vm937, %v1261, %v1260
        %v1264 = vsel %vm720, %v1262, 0.0
        %1265 = vadd.xlane.f32.xlu0 %v1264
        %v1266 = vpop.xlane.xlu0 %1265
        %v1267 = vrcp.pop %v1266
        %v1268 = vmul.f32 %v1266, %v1267
        %v1269 = vsub.f32 2.0, %v1268
        %v1270 = vmul.f32 %v1267, %v1269
        %v1272 = vrot.slane %v1270, 1
        %v1273 = vrot.slane %v1270, 2
        %v1274 = vrot.slane %v1270, 3
        %v1275 = vrot.slane %v1270, 4
        %v1276 = vrot.slane %v1270, 5
        %v1277 = vrot.slane %v1270, 6
        %v1278 = vrot.slane %v1270, 7
        %v1287 = vmul.f32 %v1226, %v1270
        %v1288 = vmul.f32 %v1228, %v1272
        %v1289 = vmul.f32 %v1230, %v1273
        %v1290 = vmul.f32 %v1232, %v1274
        %v1291 = vmul.f32 %v1234, %v1275
        %v1292 = vmul.f32 %v1236, %v1276
        %v1293 = vmul.f32 %v1238, %v1277
        %v1294 = vmul.f32 %v1240, %v1278
        %v1295 = vlaneseq
        %v1296 = vshrl.u32 %v1295, 7
        %v1297 = vsub.s32 0, %v1296
        %v1298 = vrot.slane %v1287, %v1297
        %v1299 = vlaneseq
        %v1300 = vshrl.u32 %v1299, 7
        %v1301 = vsub.s32 0, %v1300
        %v1302 = vrot.slane %v1288, %v1301
        %v1303 = vlaneseq
        %v1304 = vshrl.u32 %v1303, 7
        %v1305 = vsub.s32 0, %v1304
        %v1306 = vrot.slane %v1289, %v1305
        %v1307 = vlaneseq
        %v1308 = vshrl.u32 %v1307, 7
        %v1309 = vsub.s32 0, %v1308
        %v1310 = vrot.slane %v1290, %v1309
        %v1311 = vlaneseq
        %v1312 = vshrl.u32 %v1311, 7
        %v1313 = vsub.s32 0, %v1312
        %v1314 = vrot.slane %v1291, %v1313
        %v1315 = vlaneseq
        %v1316 = vshrl.u32 %v1315, 7
        %v1317 = vsub.s32 0, %v1316
        %v1318 = vrot.slane %v1292, %v1317
        %v1319 = vlaneseq
        %v1320 = vshrl.u32 %v1319, 7
        %v1321 = vsub.s32 0, %v1320
        %v1322 = vrot.slane %v1293, %v1321
        %v1323 = vlaneseq
        %v1324 = vshrl.u32 %v1323, 7
        %v1325 = vsub.s32 0, %v1324
        %v1326 = vrot.slane %v1294, %v1325
        %v1327 = vmul.f32 %v1298, %v737
        %v1328 = vmul.f32 %v1298, %v738
        %v1329 = vmul.f32 %v1302, %v739
        %v1330 = vmul.f32 %v1302, %v740
        %v1331 = vmul.f32 %v1306, %v741
        %v1332 = vmul.f32 %v1306, %v742
        %v1333 = vmul.f32 %v1310, %v743
        %v1334 = vmul.f32 %v1310, %v744
        %v1335 = vmul.f32 %v1314, %v745
        %v1336 = vmul.f32 %v1314, %v746
        %v1337 = vmul.f32 %v1318, %v747
        %v1338 = vmul.f32 %v1318, %v748
        %v1339 = vmul.f32 %v1322, %v749
        %v1340 = vmul.f32 %v1322, %v750
        %v1341 = vmul.f32 %v1326, %v751
        %v1342 = vmul.f32 %v1326, %v752
        %v1343 = vsel %vm720, %v1327, 0.0
        %1344 = vadd.xlane.f32.xlu0 %v1343
        %v1345 = vpop.xlane.xlu0 %1344
        %v1346 = vsel %vm720, %v1328, 0.0
        %1347 = vadd.xlane.f32.xlu0 %v1346
        %v1348 = vpop.xlane.xlu0 %1347
        %v1349 = vsel %vm720, %v1329, 0.0
        %1350 = vadd.xlane.f32.xlu0 %v1349
        %v1351 = vpop.xlane.xlu0 %1350
        %v1352 = vsel %vm720, %v1330, 0.0
        %1353 = vadd.xlane.f32.xlu0 %v1352
        %v1354 = vpop.xlane.xlu0 %1353
        %v1355 = vsel %vm720, %v1331, 0.0
        %1356 = vadd.xlane.f32.xlu0 %v1355
        %v1357 = vpop.xlane.xlu0 %1356
        %v1358 = vsel %vm720, %v1332, 0.0
        %1359 = vadd.xlane.f32.xlu0 %v1358
        %v1360 = vpop.xlane.xlu0 %1359
        %v1361 = vsel %vm720, %v1333, 0.0
        %1362 = vadd.xlane.f32.xlu0 %v1361
        %v1363 = vpop.xlane.xlu0 %1362
        %v1364 = vsel %vm720, %v1334, 0.0
        %1365 = vadd.xlane.f32.xlu0 %v1364
        %v1366 = vpop.xlane.xlu0 %1365
        %v1367 = vsel %vm720, %v1335, 0.0
        %1368 = vadd.xlane.f32.xlu0 %v1367
        %v1369 = vpop.xlane.xlu0 %1368
        %v1370 = vsel %vm720, %v1336, 0.0
        %1371 = vadd.xlane.f32.xlu0 %v1370
        %v1372 = vpop.xlane.xlu0 %1371
        %v1373 = vsel %vm720, %v1337, 0.0
        %1374 = vadd.xlane.f32.xlu0 %v1373
        %v1375 = vpop.xlane.xlu0 %1374
        %v1376 = vsel %vm720, %v1338, 0.0
        %1377 = vadd.xlane.f32.xlu0 %v1376
        %v1378 = vpop.xlane.xlu0 %1377
        %v1379 = vsel %vm720, %v1339, 0.0
        %1380 = vadd.xlane.f32.xlu0 %v1379
        %v1381 = vpop.xlane.xlu0 %1380
        %v1382 = vsel %vm720, %v1340, 0.0
        %1383 = vadd.xlane.f32.xlu0 %v1382
        %v1384 = vpop.xlane.xlu0 %1383
        %v1385 = vsel %vm720, %v1341, 0.0
        %1386 = vadd.xlane.f32.xlu0 %v1385
        %v1387 = vpop.xlane.xlu0 %1386
        %v1388 = vsel %vm720, %v1342, 0.0
        %1389 = vadd.xlane.f32.xlu0 %v1388
        %v1390 = vpop.xlane.xlu0 %1389
        %v1391 = vmul.f32 %v1345, %v1345
        %v1392 = vmul.f32 %v1348, %v1348
        %v1393 = vmul.f32 %v1351, %v1351
        %v1394 = vmul.f32 %v1354, %v1354
        %v1395 = vmul.f32 %v1357, %v1357
        %v1396 = vmul.f32 %v1360, %v1360
        %v1397 = vmul.f32 %v1363, %v1363
        %v1398 = vmul.f32 %v1366, %v1366
        %v1399 = vmul.f32 %v1369, %v1369
        %v1400 = vmul.f32 %v1372, %v1372
        %v1401 = vmul.f32 %v1375, %v1375
        %v1402 = vmul.f32 %v1378, %v1378
        %v1403 = vmul.f32 %v1381, %v1381
        %v1404 = vmul.f32 %v1384, %v1384
        %v1405 = vmul.f32 %v1387, %v1387
        %v1406 = vmul.f32 %v1390, %v1390
        %v1423 = vlaneseq
        %v1424 = vshrl.u32 %v1423, 7
        %v1425 = vsub.s32 %v850, %v1424
        %v1426 = vrot.slane %v1391, %v1425
        %v1427 = vlaneseq
        %v1428 = vshrl.u32 %v1427, 7
        %v1429 = vsub.s32 %v855, %v1428
        %v1430 = vrot.slane %v1392, %v1429
        %v1431 = vsel %vm860, %v1430, %v1426
        %v1432 = vlaneseq
        %v1433 = vshrl.u32 %v1432, 7
        %v1434 = vsub.s32 %v850, %v1433
        %v1435 = vrot.slane %v1393, %v1434
        %v1436 = vlaneseq
        %v1437 = vshrl.u32 %v1436, 7
        %v1438 = vsub.s32 %v855, %v1437
        %v1439 = vrot.slane %v1394, %v1438
        %v1440 = vsel %vm860, %v1439, %v1435
        %v1441 = vlaneseq
        %v1442 = vshrl.u32 %v1441, 7
        %v1443 = vsub.s32 %v850, %v1442
        %v1444 = vrot.slane %v1395, %v1443
        %v1445 = vlaneseq
        %v1446 = vshrl.u32 %v1445, 7
        %v1447 = vsub.s32 %v855, %v1446
        %v1448 = vrot.slane %v1396, %v1447
        %v1449 = vsel %vm860, %v1448, %v1444
        %v1450 = vlaneseq
        %v1451 = vshrl.u32 %v1450, 7
        %v1452 = vsub.s32 %v850, %v1451
        %v1453 = vrot.slane %v1397, %v1452
        %v1454 = vlaneseq
        %v1455 = vshrl.u32 %v1454, 7
        %v1456 = vsub.s32 %v855, %v1455
        %v1457 = vrot.slane %v1398, %v1456
        %v1458 = vsel %vm860, %v1457, %v1453
        %v1459 = vlaneseq
        %v1460 = vshrl.u32 %v1459, 7
        %v1461 = vsub.s32 %v850, %v1460
        %v1462 = vrot.slane %v1399, %v1461
        %v1463 = vlaneseq
        %v1464 = vshrl.u32 %v1463, 7
        %v1465 = vsub.s32 %v855, %v1464
        %v1466 = vrot.slane %v1400, %v1465
        %v1467 = vsel %vm860, %v1466, %v1462
        %v1468 = vlaneseq
        %v1469 = vshrl.u32 %v1468, 7
        %v1470 = vsub.s32 %v850, %v1469
        %v1471 = vrot.slane %v1401, %v1470
        %v1472 = vlaneseq
        %v1473 = vshrl.u32 %v1472, 7
        %v1474 = vsub.s32 %v855, %v1473
        %v1475 = vrot.slane %v1402, %v1474
        %v1476 = vsel %vm860, %v1475, %v1471
        %v1477 = vlaneseq
        %v1478 = vshrl.u32 %v1477, 7
        %v1479 = vsub.s32 %v850, %v1478
        %v1480 = vrot.slane %v1403, %v1479
        %v1481 = vlaneseq
        %v1482 = vshrl.u32 %v1481, 7
        %v1483 = vsub.s32 %v855, %v1482
        %v1484 = vrot.slane %v1404, %v1483
        %v1485 = vsel %vm860, %v1484, %v1480
        %v1486 = vlaneseq
        %v1487 = vshrl.u32 %v1486, 7
        %v1488 = vsub.s32 %v850, %v1487
        %v1489 = vrot.slane %v1405, %v1488
        %v1490 = vlaneseq
        %v1491 = vshrl.u32 %v1490, 7
        %v1492 = vsub.s32 %v855, %v1491
        %v1493 = vrot.slane %v1406, %v1492
        %v1494 = vsel %vm860, %v1493, %v1489
        %v1495 = vsel %vm925, %v1440, %v1431
        %v1496 = vsel %vm927, %v1449, %v1495
        %v1497 = vsel %vm929, %v1458, %v1496
        %v1498 = vsel %vm931, %v1467, %v1497
        %v1499 = vsel %vm933, %v1476, %v1498
        %v1500 = vsel %vm935, %v1485, %v1499
        %v1501 = vsel %vm937, %v1494, %v1500
        %v1503 = vsel %vm940, %v1501, 0.0
        %1504 = vadd.xlane.f32.xlu0 %v1503
        %v1505 = vpop.xlane.xlu0 %1504
        %v1506 = vrsqrt.pop %v1505
        %v1507 = vmul.f32 %v1505, %v1506
        %vm1508 = vcmp.eq.f32.partialorder %v1505, inf
        %v1509 = vsel %vm1508, %v1505, %v1507
        %vm1510 = vcmp.eq.f32.partialorder %v1505, 0.0
        %v1511 = vand.u32 %v1505, 2147483648
        %v1512 = vsel %vm1510, %v1511, %v1509
        %v1513 = vadd.f32 %v1505, 1.0
        %v1514 = vrcp.pop %v1513
        %v1515 = vmul.f32 %v1513, %v1514
        %v1516 = vsub.f32 2.0, %v1515
        %v1517 = vmul.f32 %v1514, %v1516
        %v1518 = vmul.f32 %v1512, %v1517
        %v1520 = vlaneseq
        %v1521 = vshrl.u32 %v1520, 7
        %v1522 = vsub.s32 0, %v1521
        %v1523 = vrot.slane %v1518, %v1522
        %v1524 = vlaneseq
        %v1525 = vshrl.u32 %v1524, 7
        %v1526 = vsub.s32 1, %v1525
        %v1527 = vrot.slane %v1518, %v1526
        %v1528 = vlaneseq
        %v1529 = vshrl.u32 %v1528, 7
        %v1530 = vsub.s32 2, %v1529
        %v1531 = vrot.slane %v1518, %v1530
        %v1532 = vlaneseq
        %v1533 = vshrl.u32 %v1532, 7
        %v1534 = vsub.s32 3, %v1533
        %v1535 = vrot.slane %v1518, %v1534
        %v1536 = vlaneseq
        %v1537 = vshrl.u32 %v1536, 7
        %v1538 = vsub.s32 4, %v1537
        %v1539 = vrot.slane %v1518, %v1538
        %v1540 = vlaneseq
        %v1541 = vshrl.u32 %v1540, 7
        %v1542 = vsub.s32 5, %v1541
        %v1543 = vrot.slane %v1518, %v1542
        %v1544 = vlaneseq
        %v1545 = vshrl.u32 %v1544, 7
        %v1546 = vsub.s32 6, %v1545
        %v1547 = vrot.slane %v1518, %v1546
        %v1548 = vlaneseq
        %v1549 = vshrl.u32 %v1548, 7
        %v1550 = vsub.s32 7, %v1549
        %v1551 = vrot.slane %v1518, %v1550
        %v1560 = vmul.f32 %v1345, %v1523
        %v1561 = vmul.f32 %v1348, %v1523
        %v1562 = vmul.f32 %v1351, %v1527
        %v1563 = vmul.f32 %v1354, %v1527
        %v1564 = vmul.f32 %v1357, %v1531
        %v1565 = vmul.f32 %v1360, %v1531
        %v1566 = vmul.f32 %v1363, %v1535
        %v1567 = vmul.f32 %v1366, %v1535
        %v1568 = vmul.f32 %v1369, %v1539
        %v1569 = vmul.f32 %v1372, %v1539
        %v1570 = vmul.f32 %v1375, %v1543
        %v1571 = vmul.f32 %v1378, %v1543
        %v1572 = vmul.f32 %v1381, %v1547
        %v1573 = vmul.f32 %v1384, %v1547
        %v1574 = vmul.f32 %v1387, %v1551
        %v1575 = vmul.f32 %v1390, %v1551
        %1577 = vset.pattern.permute.xlu0 0
        %1578 = vperm.xlu0 %1577, %v1560
        %v1579 = vpop.permute.xlu0 %1578
        %1582 = vset.pattern.permute.xlu0 0
        %1583 = vperm.xlu0 %1582, %v1561
        %v1584 = vpop.permute.xlu0 %1583
        %1587 = vset.pattern.permute.xlu0 0
        %1588 = vperm.xlu0 %1587, %v1562
        %v1589 = vpop.permute.xlu0 %1588
        %1592 = vset.pattern.permute.xlu0 0
        %1593 = vperm.xlu0 %1592, %v1563
        %v1594 = vpop.permute.xlu0 %1593
        %1597 = vset.pattern.permute.xlu0 0
        %1598 = vperm.xlu0 %1597, %v1564
        %v1599 = vpop.permute.xlu0 %1598
        %1602 = vset.pattern.permute.xlu0 0
        %1603 = vperm.xlu0 %1602, %v1565
        %v1604 = vpop.permute.xlu0 %1603
        %1607 = vset.pattern.permute.xlu0 0
        %1608 = vperm.xlu0 %1607, %v1566
        %v1609 = vpop.permute.xlu0 %1608
        %1612 = vset.pattern.permute.xlu0 0
        %1613 = vperm.xlu0 %1612, %v1567
        %v1614 = vpop.permute.xlu0 %1613
        %1617 = vset.pattern.permute.xlu0 0
        %1618 = vperm.xlu0 %1617, %v1568
        %v1619 = vpop.permute.xlu0 %1618
        %1622 = vset.pattern.permute.xlu0 0
        %1623 = vperm.xlu0 %1622, %v1569
        %v1624 = vpop.permute.xlu0 %1623
        %1627 = vset.pattern.permute.xlu0 0
        %1628 = vperm.xlu0 %1627, %v1570
        %v1629 = vpop.permute.xlu0 %1628
        %1632 = vset.pattern.permute.xlu0 0
        %1633 = vperm.xlu0 %1632, %v1571
        %v1634 = vpop.permute.xlu0 %1633
        %1637 = vset.pattern.permute.xlu0 0
        %1638 = vperm.xlu0 %1637, %v1572
        %v1639 = vpop.permute.xlu0 %1638
        %1642 = vset.pattern.permute.xlu0 0
        %1643 = vperm.xlu0 %1642, %v1573
        %v1644 = vpop.permute.xlu0 %1643
        %1647 = vset.pattern.permute.xlu0 0
        %1648 = vperm.xlu0 %1647, %v1574
        %v1649 = vpop.permute.xlu0 %1648
        %1652 = vset.pattern.permute.xlu0 0
        %1653 = vperm.xlu0 %1652, %v1575
        %v1654 = vpop.permute.xlu0 %1653
        %v1656 = vmul.f32 %v737, %v1579
        %v1657 = vmul.f32 %v738, %v1584
        %v1658 = vmul.f32 %v739, %v1589
        %v1659 = vmul.f32 %v740, %v1594
        %v1660 = vmul.f32 %v741, %v1599
        %v1661 = vmul.f32 %v742, %v1604
        %v1662 = vmul.f32 %v743, %v1609
        %v1663 = vmul.f32 %v744, %v1614
        %v1664 = vmul.f32 %v745, %v1619
        %v1665 = vmul.f32 %v746, %v1624
        %v1666 = vmul.f32 %v747, %v1629
        %v1667 = vmul.f32 %v748, %v1634
        %v1668 = vmul.f32 %v749, %v1639
        %v1669 = vmul.f32 %v750, %v1644
        %v1670 = vmul.f32 %v751, %v1649
        %v1671 = vmul.f32 %v752, %v1654
        %v1672 = vsel %vm720, %v1656, 0.0
        %v1673 = vsel %vm720, %v1657, 0.0
        %v1674 = vadd.f32 %v1672, %v1673
        %v1675 = vrot.slane %v1674, 4
        %v1676 = vadd.f32 %v1674, %v1675
        %v1677 = vrot.slane %v1676, 2
        %v1678 = vadd.f32 %v1676, %v1677
        %v1679 = vrot.slane %v1678, 1
        %v1680 = vadd.f32 %v1678, %v1679
        %v1681 = vsel %vm720, %v1658, 0.0
        %v1682 = vsel %vm720, %v1659, 0.0
        %v1683 = vadd.f32 %v1681, %v1682
        %v1684 = vrot.slane %v1683, 4
        %v1685 = vadd.f32 %v1683, %v1684
        %v1686 = vrot.slane %v1685, 2
        %v1687 = vadd.f32 %v1685, %v1686
        %v1688 = vrot.slane %v1687, 1
        %v1689 = vadd.f32 %v1687, %v1688
        %v1690 = vsel %vm720, %v1660, 0.0
        %v1691 = vsel %vm720, %v1661, 0.0
        %v1692 = vadd.f32 %v1690, %v1691
        %v1693 = vrot.slane %v1692, 4
        %v1694 = vadd.f32 %v1692, %v1693
        %v1695 = vrot.slane %v1694, 2
        %v1696 = vadd.f32 %v1694, %v1695
        %v1697 = vrot.slane %v1696, 1
        %v1698 = vadd.f32 %v1696, %v1697
        %v1699 = vsel %vm720, %v1662, 0.0
        %v1700 = vsel %vm720, %v1663, 0.0
        %v1701 = vadd.f32 %v1699, %v1700
        %v1702 = vrot.slane %v1701, 4
        %v1703 = vadd.f32 %v1701, %v1702
        %v1704 = vrot.slane %v1703, 2
        %v1705 = vadd.f32 %v1703, %v1704
        %v1706 = vrot.slane %v1705, 1
        %v1707 = vadd.f32 %v1705, %v1706
        %v1708 = vsel %vm720, %v1664, 0.0
        %v1709 = vsel %vm720, %v1665, 0.0
        %v1710 = vadd.f32 %v1708, %v1709
        %v1711 = vrot.slane %v1710, 4
        %v1712 = vadd.f32 %v1710, %v1711
        %v1713 = vrot.slane %v1712, 2
        %v1714 = vadd.f32 %v1712, %v1713
        %v1715 = vrot.slane %v1714, 1
        %v1716 = vadd.f32 %v1714, %v1715
        %v1717 = vsel %vm720, %v1666, 0.0
        %v1718 = vsel %vm720, %v1667, 0.0
        %v1719 = vadd.f32 %v1717, %v1718
        %v1720 = vrot.slane %v1719, 4
        %v1721 = vadd.f32 %v1719, %v1720
        %v1722 = vrot.slane %v1721, 2
        %v1723 = vadd.f32 %v1721, %v1722
        %v1724 = vrot.slane %v1723, 1
        %v1725 = vadd.f32 %v1723, %v1724
        %v1726 = vsel %vm720, %v1668, 0.0
        %v1727 = vsel %vm720, %v1669, 0.0
        %v1728 = vadd.f32 %v1726, %v1727
        %v1729 = vrot.slane %v1728, 4
        %v1730 = vadd.f32 %v1728, %v1729
        %v1731 = vrot.slane %v1730, 2
        %v1732 = vadd.f32 %v1730, %v1731
        %v1733 = vrot.slane %v1732, 1
        %v1734 = vadd.f32 %v1732, %v1733
        %v1735 = vsel %vm720, %v1670, 0.0
        %v1736 = vsel %vm720, %v1671, 0.0
        %v1737 = vadd.f32 %v1735, %v1736
        %v1738 = vrot.slane %v1737, 4
        %v1739 = vadd.f32 %v1737, %v1738
        %v1740 = vrot.slane %v1739, 2
        %v1741 = vadd.f32 %v1739, %v1740
        %v1742 = vrot.slane %v1741, 1
        %v1743 = vadd.f32 %v1741, %v1742
        %v1744 = vadd.f32 %v1118, %v1680
        %v1745 = vadd.f32 %v1127, %v1689
        %v1746 = vadd.f32 %v1136, %v1698
        %v1747 = vadd.f32 %v1145, %v1707
        %v1748 = vadd.f32 %v1154, %v1716
        %v1749 = vadd.f32 %v1163, %v1725
        %v1750 = vadd.f32 %v1172, %v1734
        %v1751 = vadd.f32 %v1181, %v1743
        %v1760 = vsel %vm925, %v1745, %v1744
        %v1761 = vsel %vm927, %v1746, %v1760
        %v1762 = vsel %vm929, %v1747, %v1761
        %v1763 = vsel %vm931, %v1748, %v1762
        %v1764 = vsel %vm933, %v1749, %v1763
        %v1765 = vsel %vm935, %v1750, %v1764
        %v1766 = vsel %vm937, %v1751, %v1765
        %v1768 = vsel %vm720, %v1766, -inf
        %1769 = vmax.xlane.f32.xlu0 %v1768
        %v1770 = vpop.xlane.xlu0 %1769
        %v1772 = vrot.slane %v1770, 1
        %v1773 = vrot.slane %v1770, 2
        %v1774 = vrot.slane %v1770, 3
        %v1775 = vrot.slane %v1770, 4
        %v1776 = vrot.slane %v1770, 5
        %v1777 = vrot.slane %v1770, 6
        %v1778 = vrot.slane %v1770, 7
        %v1787 = vsub.f32 %v1744, %v1770
        %v1788 = vsub.f32 %v1745, %v1772
        %v1789 = vsub.f32 %v1746, %v1773
        %v1790 = vsub.f32 %v1747, %v1774
        %v1791 = vsub.f32 %v1748, %v1775
        %v1792 = vsub.f32 %v1749, %v1776
        %v1793 = vsub.f32 %v1750, %v1777
        %v1794 = vsub.f32 %v1751, %v1778
        %v1795 = vmul.f32 %v1787, 1.442695
        %v1796 = vpow.pop %v1795
        %v1797 = vmul.f32 %v1788, 1.442695
        %v1798 = vpow.pop %v1797
        %v1799 = vmul.f32 %v1789, 1.442695
        %v1800 = vpow.pop %v1799
        %v1801 = vmul.f32 %v1790, 1.442695
        %v1802 = vpow.pop %v1801
        %v1803 = vmul.f32 %v1791, 1.442695
        %v1804 = vpow.pop %v1803
        %v1805 = vmul.f32 %v1792, 1.442695
        %v1806 = vpow.pop %v1805
        %v1807 = vmul.f32 %v1793, 1.442695
        %v1808 = vpow.pop %v1807
        %v1809 = vmul.f32 %v1794, 1.442695
        %v1810 = vpow.pop %v1809
        %v1819 = vrot.slane %v1798, 7
        %v1820 = vsel %vm925, %v1819, %v1796
        %v1821 = vrot.slane %v1800, 6
        %v1822 = vsel %vm927, %v1821, %v1820
        %v1823 = vrot.slane %v1802, 5
        %v1824 = vsel %vm929, %v1823, %v1822
        %v1825 = vrot.slane %v1804, 4
        %v1826 = vsel %vm931, %v1825, %v1824
        %v1827 = vrot.slane %v1806, 3
        %v1828 = vsel %vm933, %v1827, %v1826
        %v1829 = vrot.slane %v1808, 2
        %v1830 = vsel %vm935, %v1829, %v1828
        %v1831 = vrot.slane %v1810, 1
        %v1832 = vsel %vm937, %v1831, %v1830
        %v1834 = vsel %vm720, %v1832, 0.0
        %1835 = vadd.xlane.f32.xlu0 %v1834
        %v1836 = vpop.xlane.xlu0 %1835
        %v1837 = vrcp.pop %v1836
        %v1838 = vmul.f32 %v1836, %v1837
        %v1839 = vsub.f32 2.0, %v1838
        %v1840 = vmul.f32 %v1837, %v1839
        %v1842 = vrot.slane %v1840, 1
        %v1843 = vrot.slane %v1840, 2
        %v1844 = vrot.slane %v1840, 3
        %v1845 = vrot.slane %v1840, 4
        %v1846 = vrot.slane %v1840, 5
        %v1847 = vrot.slane %v1840, 6
        %v1848 = vrot.slane %v1840, 7
        %v1857 = vmul.f32 %v1796, %v1840
        %v1858 = vmul.f32 %v1798, %v1842
        %v1859 = vmul.f32 %v1800, %v1843
        %v1860 = vmul.f32 %v1802, %v1844
        %v1861 = vmul.f32 %v1804, %v1845
        %v1862 = vmul.f32 %v1806, %v1846
        %v1863 = vmul.f32 %v1808, %v1847
        %v1864 = vmul.f32 %v1810, %v1848
        %v1865 = vlaneseq
        %v1866 = vshrl.u32 %v1865, 7
        %v1867 = vsub.s32 0, %v1866
        %v1868 = vrot.slane %v1857, %v1867
        %v1869 = vlaneseq
        %v1870 = vshrl.u32 %v1869, 7
        %v1871 = vsub.s32 0, %v1870
        %v1872 = vrot.slane %v1858, %v1871
        %v1873 = vlaneseq
        %v1874 = vshrl.u32 %v1873, 7
        %v1875 = vsub.s32 0, %v1874
        %v1876 = vrot.slane %v1859, %v1875
        %v1877 = vlaneseq
        %v1878 = vshrl.u32 %v1877, 7
        %v1879 = vsub.s32 0, %v1878
        %v1880 = vrot.slane %v1860, %v1879
        %v1881 = vlaneseq
        %v1882 = vshrl.u32 %v1881, 7
        %v1883 = vsub.s32 0, %v1882
        %v1884 = vrot.slane %v1861, %v1883
        %v1885 = vlaneseq
        %v1886 = vshrl.u32 %v1885, 7
        %v1887 = vsub.s32 0, %v1886
        %v1888 = vrot.slane %v1862, %v1887
        %v1889 = vlaneseq
        %v1890 = vshrl.u32 %v1889, 7
        %v1891 = vsub.s32 0, %v1890
        %v1892 = vrot.slane %v1863, %v1891
        %v1893 = vlaneseq
        %v1894 = vshrl.u32 %v1893, 7
        %v1895 = vsub.s32 0, %v1894
        %v1896 = vrot.slane %v1864, %v1895
        %v1897 = vmul.f32 %v1868, %v737
        %v1898 = vmul.f32 %v1868, %v738
        %v1899 = vmul.f32 %v1872, %v739
        %v1900 = vmul.f32 %v1872, %v740
        %v1901 = vmul.f32 %v1876, %v741
        %v1902 = vmul.f32 %v1876, %v742
        %v1903 = vmul.f32 %v1880, %v743
        %v1904 = vmul.f32 %v1880, %v744
        %v1905 = vmul.f32 %v1884, %v745
        %v1906 = vmul.f32 %v1884, %v746
        %v1907 = vmul.f32 %v1888, %v747
        %v1908 = vmul.f32 %v1888, %v748
        %v1909 = vmul.f32 %v1892, %v749
        %v1910 = vmul.f32 %v1892, %v750
        %v1911 = vmul.f32 %v1896, %v751
        %v1912 = vmul.f32 %v1896, %v752
        %v1913 = vsel %vm720, %v1897, 0.0
        %1914 = vadd.xlane.f32.xlu0 %v1913
        %v1915 = vpop.xlane.xlu0 %1914
        %v1916 = vsel %vm720, %v1898, 0.0
        %1917 = vadd.xlane.f32.xlu0 %v1916
        %v1918 = vpop.xlane.xlu0 %1917
        %v1919 = vsel %vm720, %v1899, 0.0
        %1920 = vadd.xlane.f32.xlu0 %v1919
        %v1921 = vpop.xlane.xlu0 %1920
        %v1922 = vsel %vm720, %v1900, 0.0
        %1923 = vadd.xlane.f32.xlu0 %v1922
        %v1924 = vpop.xlane.xlu0 %1923
        %v1925 = vsel %vm720, %v1901, 0.0
        %1926 = vadd.xlane.f32.xlu0 %v1925
        %v1927 = vpop.xlane.xlu0 %1926
        %v1928 = vsel %vm720, %v1902, 0.0
        %1929 = vadd.xlane.f32.xlu0 %v1928
        %v1930 = vpop.xlane.xlu0 %1929
        %v1931 = vsel %vm720, %v1903, 0.0
        %1932 = vadd.xlane.f32.xlu0 %v1931
        %v1933 = vpop.xlane.xlu0 %1932
        %v1934 = vsel %vm720, %v1904, 0.0
        %1935 = vadd.xlane.f32.xlu0 %v1934
        %v1936 = vpop.xlane.xlu0 %1935
        %v1937 = vsel %vm720, %v1905, 0.0
        %1938 = vadd.xlane.f32.xlu0 %v1937
        %v1939 = vpop.xlane.xlu0 %1938
        %v1940 = vsel %vm720, %v1906, 0.0
        %1941 = vadd.xlane.f32.xlu0 %v1940
        %v1942 = vpop.xlane.xlu0 %1941
        %v1943 = vsel %vm720, %v1907, 0.0
        %1944 = vadd.xlane.f32.xlu0 %v1943
        %v1945 = vpop.xlane.xlu0 %1944
        %v1946 = vsel %vm720, %v1908, 0.0
        %1947 = vadd.xlane.f32.xlu0 %v1946
        %v1948 = vpop.xlane.xlu0 %1947
        %v1949 = vsel %vm720, %v1909, 0.0
        %1950 = vadd.xlane.f32.xlu0 %v1949
        %v1951 = vpop.xlane.xlu0 %1950
        %v1952 = vsel %vm720, %v1910, 0.0
        %1953 = vadd.xlane.f32.xlu0 %v1952
        %v1954 = vpop.xlane.xlu0 %1953
        %v1955 = vsel %vm720, %v1911, 0.0
        %1956 = vadd.xlane.f32.xlu0 %v1955
        %v1957 = vpop.xlane.xlu0 %1956
        %v1958 = vsel %vm720, %v1912, 0.0
        %1959 = vadd.xlane.f32.xlu0 %v1958
        %v1960 = vpop.xlane.xlu0 %1959
        %v1961 = vmul.f32 %v1915, %v1915
        %v1962 = vmul.f32 %v1918, %v1918
        %v1963 = vmul.f32 %v1921, %v1921
        %v1964 = vmul.f32 %v1924, %v1924
        %v1965 = vmul.f32 %v1927, %v1927
        %v1966 = vmul.f32 %v1930, %v1930
        %v1967 = vmul.f32 %v1933, %v1933
        %v1968 = vmul.f32 %v1936, %v1936
        %v1969 = vmul.f32 %v1939, %v1939
        %v1970 = vmul.f32 %v1942, %v1942
        %v1971 = vmul.f32 %v1945, %v1945
        %v1972 = vmul.f32 %v1948, %v1948
        %v1973 = vmul.f32 %v1951, %v1951
        %v1974 = vmul.f32 %v1954, %v1954
        %v1975 = vmul.f32 %v1957, %v1957
        %v1976 = vmul.f32 %v1960, %v1960
        %v1993 = vlaneseq
        %v1994 = vshrl.u32 %v1993, 7
        %v1995 = vsub.s32 %v850, %v1994
        %v1996 = vrot.slane %v1961, %v1995
        %v1997 = vlaneseq
        %v1998 = vshrl.u32 %v1997, 7
        %v1999 = vsub.s32 %v855, %v1998
        %v2000 = vrot.slane %v1962, %v1999
        %v2001 = vsel %vm860, %v2000, %v1996
        %v2002 = vlaneseq
        %v2003 = vshrl.u32 %v2002, 7
        %v2004 = vsub.s32 %v850, %v2003
        %v2005 = vrot.slane %v1963, %v2004
        %v2006 = vlaneseq
        %v2007 = vshrl.u32 %v2006, 7
        %v2008 = vsub.s32 %v855, %v2007
        %v2009 = vrot.slane %v1964, %v2008
        %v2010 = vsel %vm860, %v2009, %v2005
        %v2011 = vlaneseq
        %v2012 = vshrl.u32 %v2011, 7
        %v2013 = vsub.s32 %v850, %v2012
        %v2014 = vrot.slane %v1965, %v2013
        %v2015 = vlaneseq
        %v2016 = vshrl.u32 %v2015, 7
        %v2017 = vsub.s32 %v855, %v2016
        %v2018 = vrot.slane %v1966, %v2017
        %v2019 = vsel %vm860, %v2018, %v2014
        %v2020 = vlaneseq
        %v2021 = vshrl.u32 %v2020, 7
        %v2022 = vsub.s32 %v850, %v2021
        %v2023 = vrot.slane %v1967, %v2022
        %v2024 = vlaneseq
        %v2025 = vshrl.u32 %v2024, 7
        %v2026 = vsub.s32 %v855, %v2025
        %v2027 = vrot.slane %v1968, %v2026
        %v2028 = vsel %vm860, %v2027, %v2023
        %v2029 = vlaneseq
        %v2030 = vshrl.u32 %v2029, 7
        %v2031 = vsub.s32 %v850, %v2030
        %v2032 = vrot.slane %v1969, %v2031
        %v2033 = vlaneseq
        %v2034 = vshrl.u32 %v2033, 7
        %v2035 = vsub.s32 %v855, %v2034
        %v2036 = vrot.slane %v1970, %v2035
        %v2037 = vsel %vm860, %v2036, %v2032
        %v2038 = vlaneseq
        %v2039 = vshrl.u32 %v2038, 7
        %v2040 = vsub.s32 %v850, %v2039
        %v2041 = vrot.slane %v1971, %v2040
        %v2042 = vlaneseq
        %v2043 = vshrl.u32 %v2042, 7
        %v2044 = vsub.s32 %v855, %v2043
        %v2045 = vrot.slane %v1972, %v2044
        %v2046 = vsel %vm860, %v2045, %v2041
        %v2047 = vlaneseq
        %v2048 = vshrl.u32 %v2047, 7
        %v2049 = vsub.s32 %v850, %v2048
        %v2050 = vrot.slane %v1973, %v2049
        %v2051 = vlaneseq
        %v2052 = vshrl.u32 %v2051, 7
        %v2053 = vsub.s32 %v855, %v2052
        %v2054 = vrot.slane %v1974, %v2053
        %v2055 = vsel %vm860, %v2054, %v2050
        %v2056 = vlaneseq
        %v2057 = vshrl.u32 %v2056, 7
        %v2058 = vsub.s32 %v850, %v2057
        %v2059 = vrot.slane %v1975, %v2058
        %v2060 = vlaneseq
        %v2061 = vshrl.u32 %v2060, 7
        %v2062 = vsub.s32 %v855, %v2061
        %v2063 = vrot.slane %v1976, %v2062
        %v2064 = vsel %vm860, %v2063, %v2059
        %v2065 = vsel %vm925, %v2010, %v2001
        %v2066 = vsel %vm927, %v2019, %v2065
        %v2067 = vsel %vm929, %v2028, %v2066
        %v2068 = vsel %vm931, %v2037, %v2067
        %v2069 = vsel %vm933, %v2046, %v2068
        %v2070 = vsel %vm935, %v2055, %v2069
        %v2071 = vsel %vm937, %v2064, %v2070
        %v2073 = vsel %vm940, %v2071, 0.0
        %2074 = vadd.xlane.f32.xlu0 %v2073
        %v2075 = vpop.xlane.xlu0 %2074
        %v2076 = vrsqrt.pop %v2075
        %v2077 = vmul.f32 %v2075, %v2076
        %vm2078 = vcmp.eq.f32.partialorder %v2075, inf
        %v2079 = vsel %vm2078, %v2075, %v2077
        %vm2080 = vcmp.eq.f32.partialorder %v2075, 0.0
        %v2081 = vand.u32 %v2075, 2147483648
        %v2082 = vsel %vm2080, %v2081, %v2079
        %v2083 = vadd.f32 %v2075, 1.0
        %v2084 = vrcp.pop %v2083
        %v2085 = vmul.f32 %v2083, %v2084
        %v2086 = vsub.f32 2.0, %v2085
        %v2087 = vmul.f32 %v2084, %v2086
        %v2088 = vmul.f32 %v2082, %v2087
        %v2090 = vlaneseq
        %v2091 = vshrl.u32 %v2090, 7
        %v2092 = vsub.s32 0, %v2091
        %v2093 = vrot.slane %v2088, %v2092
        %v2094 = vlaneseq
        %v2095 = vshrl.u32 %v2094, 7
        %v2096 = vsub.s32 1, %v2095
        %v2097 = vrot.slane %v2088, %v2096
        %v2098 = vlaneseq
        %v2099 = vshrl.u32 %v2098, 7
        %v2100 = vsub.s32 2, %v2099
        %v2101 = vrot.slane %v2088, %v2100
        %v2102 = vlaneseq
        %v2103 = vshrl.u32 %v2102, 7
        %v2104 = vsub.s32 3, %v2103
        %v2105 = vrot.slane %v2088, %v2104
        %v2106 = vlaneseq
        %v2107 = vshrl.u32 %v2106, 7
        %v2108 = vsub.s32 4, %v2107
        %v2109 = vrot.slane %v2088, %v2108
        %v2110 = vlaneseq
        %v2111 = vshrl.u32 %v2110, 7
        %v2112 = vsub.s32 5, %v2111
        %v2113 = vrot.slane %v2088, %v2112
        %v2114 = vlaneseq
        %v2115 = vshrl.u32 %v2114, 7
        %v2116 = vsub.s32 6, %v2115
        %v2117 = vrot.slane %v2088, %v2116
        %v2118 = vlaneseq
        %v2119 = vshrl.u32 %v2118, 7
        %v2120 = vsub.s32 7, %v2119
        %v2121 = vrot.slane %v2088, %v2120
        %v2130 = vmul.f32 %v1915, %v2093
        %v2131 = vmul.f32 %v1918, %v2093
        %v2132 = vmul.f32 %v1921, %v2097
        %v2133 = vmul.f32 %v1924, %v2097
        %v2134 = vmul.f32 %v1927, %v2101
        %v2135 = vmul.f32 %v1930, %v2101
        %v2136 = vmul.f32 %v1933, %v2105
        %v2137 = vmul.f32 %v1936, %v2105
        %v2138 = vmul.f32 %v1939, %v2109
        %v2139 = vmul.f32 %v1942, %v2109
        %v2140 = vmul.f32 %v1945, %v2113
        %v2141 = vmul.f32 %v1948, %v2113
        %v2142 = vmul.f32 %v1951, %v2117
        %v2143 = vmul.f32 %v1954, %v2117
        %v2144 = vmul.f32 %v1957, %v2121
        %v2145 = vmul.f32 %v1960, %v2121
        %2162 = vset.pattern.permute.xlu0 0
        %2163 = vperm.xlu0 %2162, %v2130
        %v2164 = vpop.permute.xlu0 %2163
        %2165 = vset.pattern.permute.xlu0 0
        %2166 = vperm.xlu0 %2165, %v2131
        %v2167 = vpop.permute.xlu0 %2166
        %2168 = vset.pattern.permute.xlu0 0
        %2169 = vperm.xlu0 %2168, %v2132
        %v2170 = vpop.permute.xlu0 %2169
        %2171 = vset.pattern.permute.xlu0 0
        %2172 = vperm.xlu0 %2171, %v2133
        %v2173 = vpop.permute.xlu0 %2172
        %2174 = vset.pattern.permute.xlu0 0
        %2175 = vperm.xlu0 %2174, %v2134
        %v2176 = vpop.permute.xlu0 %2175
        %2177 = vset.pattern.permute.xlu0 0
        %2178 = vperm.xlu0 %2177, %v2135
        %v2179 = vpop.permute.xlu0 %2178
        %2180 = vset.pattern.permute.xlu0 0
        %2181 = vperm.xlu0 %2180, %v2136
        %v2182 = vpop.permute.xlu0 %2181
        %2183 = vset.pattern.permute.xlu0 0
        %2184 = vperm.xlu0 %2183, %v2137
        %v2185 = vpop.permute.xlu0 %2184
        %2186 = vset.pattern.permute.xlu0 0
        %2187 = vperm.xlu0 %2186, %v2138
        %v2188 = vpop.permute.xlu0 %2187
        %2189 = vset.pattern.permute.xlu0 0
        %2190 = vperm.xlu0 %2189, %v2139
        %v2191 = vpop.permute.xlu0 %2190
        %2192 = vset.pattern.permute.xlu0 0
        %2193 = vperm.xlu0 %2192, %v2140
        %v2194 = vpop.permute.xlu0 %2193
        %2195 = vset.pattern.permute.xlu0 0
        %2196 = vperm.xlu0 %2195, %v2141
        %v2197 = vpop.permute.xlu0 %2196
        %2198 = vset.pattern.permute.xlu0 0
        %2199 = vperm.xlu0 %2198, %v2142
        %v2200 = vpop.permute.xlu0 %2199
        %2201 = vset.pattern.permute.xlu0 0
        %2202 = vperm.xlu0 %2201, %v2143
        %v2203 = vpop.permute.xlu0 %2202
        %2204 = vset.pattern.permute.xlu0 0
        %2205 = vperm.xlu0 %2204, %v2144
        %v2206 = vpop.permute.xlu0 %2205
        %2207 = vset.pattern.permute.xlu0 0
        %2208 = vperm.xlu0 %2207, %v2145
        %v2209 = vpop.permute.xlu0 %2208
        %v2210 = vlaneseq
        %v2211 = vshrl.u32 %v2210, 7
        %v2212 = vsub.s32 %v850, %v2211
        %v2213 = vrot.slane %v2164, %v2212
        %v2214 = vlaneseq
        %v2215 = vshrl.u32 %v2214, 7
        %v2216 = vsub.s32 %v855, %v2215
        %v2217 = vrot.slane %v2167, %v2216
        %v2218 = vsel %vm860, %v2217, %v2213
        %v2219 = vlaneseq
        %v2220 = vshrl.u32 %v2219, 7
        %v2221 = vsub.s32 %v850, %v2220
        %v2222 = vrot.slane %v2170, %v2221
        %v2223 = vlaneseq
        %v2224 = vshrl.u32 %v2223, 7
        %v2225 = vsub.s32 %v855, %v2224
        %v2226 = vrot.slane %v2173, %v2225
        %v2227 = vsel %vm860, %v2226, %v2222
        %v2228 = vlaneseq
        %v2229 = vshrl.u32 %v2228, 7
        %v2230 = vsub.s32 %v850, %v2229
        %v2231 = vrot.slane %v2176, %v2230
        %v2232 = vlaneseq
        %v2233 = vshrl.u32 %v2232, 7
        %v2234 = vsub.s32 %v855, %v2233
        %v2235 = vrot.slane %v2179, %v2234
        %v2236 = vsel %vm860, %v2235, %v2231
        %v2237 = vlaneseq
        %v2238 = vshrl.u32 %v2237, 7
        %v2239 = vsub.s32 %v850, %v2238
        %v2240 = vrot.slane %v2182, %v2239
        %v2241 = vlaneseq
        %v2242 = vshrl.u32 %v2241, 7
        %v2243 = vsub.s32 %v855, %v2242
        %v2244 = vrot.slane %v2185, %v2243
        %v2245 = vsel %vm860, %v2244, %v2240
        %v2246 = vlaneseq
        %v2247 = vshrl.u32 %v2246, 7
        %v2248 = vsub.s32 %v850, %v2247
        %v2249 = vrot.slane %v2188, %v2248
        %v2250 = vlaneseq
        %v2251 = vshrl.u32 %v2250, 7
        %v2252 = vsub.s32 %v855, %v2251
        %v2253 = vrot.slane %v2191, %v2252
        %v2254 = vsel %vm860, %v2253, %v2249
        %v2255 = vlaneseq
        %v2256 = vshrl.u32 %v2255, 7
        %v2257 = vsub.s32 %v850, %v2256
        %v2258 = vrot.slane %v2194, %v2257
        %v2259 = vlaneseq
        %v2260 = vshrl.u32 %v2259, 7
        %v2261 = vsub.s32 %v855, %v2260
        %v2262 = vrot.slane %v2197, %v2261
        %v2263 = vsel %vm860, %v2262, %v2258
        %v2264 = vlaneseq
        %v2265 = vshrl.u32 %v2264, 7
        %v2266 = vsub.s32 %v850, %v2265
        %v2267 = vrot.slane %v2200, %v2266
        %v2268 = vlaneseq
        %v2269 = vshrl.u32 %v2268, 7
        %v2270 = vsub.s32 %v855, %v2269
        %v2271 = vrot.slane %v2203, %v2270
        %v2272 = vsel %vm860, %v2271, %v2267
        %v2273 = vlaneseq
        %v2274 = vshrl.u32 %v2273, 7
        %v2275 = vsub.s32 %v850, %v2274
        %v2276 = vrot.slane %v2206, %v2275
        %v2277 = vlaneseq
        %v2278 = vshrl.u32 %v2277, 7
        %v2279 = vsub.s32 %v855, %v2278
        %v2280 = vrot.slane %v2209, %v2279
        %v2281 = vsel %vm860, %v2280, %v2276
        %v2282 = vsel %vm925, %v2227, %v2218
        %v2283 = vsel %vm927, %v2236, %v2282
        %v2284 = vsel %vm929, %v2245, %v2283
        %v2285 = vsel %vm931, %v2254, %v2284
        %v2286 = vsel %vm933, %v2263, %v2285
        %v2287 = vsel %vm935, %v2272, %v2286
        %v2288 = vsel %vm937, %v2281, %v2287
        %2290 = vst.msk [vmem:[%s198] sm:$0xff] %vm940, %v2288
        %s2291 = sand.u32 %s94, 1
        %s2292 = scalar_lea.sflag [#allocation5], %s2291
        %s2293 = sand.u32 %s94, 1
        %s2294 = smul.addr %s2293, 8
        %s2295 = scalar_lea.vmem [#allocation8], %s2294
        // Predicated region
        $region37: #{tpu_custom_call.1} parent=27 // pred_check
          %p2296 = pneg %p104
        $region38: #{tpu_custom_call.1} parent=27 // pred_check_branch
          %2298 = sbr.rel (%p2296) target = $region40
        $region39: #{tpu_custom_call.1} parent=27 // pred_region
          %s2300 = ssub.s32 128, 128
          %2301 = vsyncadd %s2292, %s2300
          %s2302 = sadd.s32 %s24, %s25
          %s2303 = smul.addr %s2302, 128
          %s2304 = scalar_lea.hbm %s2, %s2303
          %s2306 = sshll.u32 %s2295, 4
          %s2307 = int_to_ptr.vmem [resolvable:$true] %s2306
          %2309 = dma.vmem_to_hbm [thread:$0]  %s2307, 128, %s2304, %s2292
        $region40: #{tpu_custom_call.1} parent=27 // pred_fallthru
          _
      $region28: #{tpu_custom_call.1} parent=5 // pred_fallthru
        _
      %p2310 = scmp.le.s32.totalorder 2, %s15
      // Predicated region
      $region41: #{tpu_custom_call.1} parent=5 // pred_check
        %p2311 = pneg %p2310
      $region42: #{tpu_custom_call.1} parent=5 // pred_check_branch
        %2313 = sbr.rel (%p2311) target = $region44
      $region43: #{tpu_custom_call.1} parent=5 // pred_region
        %s2314 = ssub.s32 %s15, 2
        // Predicated region
        $region45: #{tpu_custom_call.1} parent=43 // pred_check
          %p2315 = pneg %p110
        $region46: #{tpu_custom_call.1} parent=43 // pred_check_branch
          %2317 = sbr.rel (%p2315) target = $region48
        $region47: #{tpu_custom_call.1} parent=43 // pred_region
          %s2318 = sand.u32 %s95, 1
          %s2319 = scalar_lea.sflag [#allocation5], %s2318
          %s2320 = sand.u32 %s95, 1
          %s2321 = smul.addr %s2320, 8
          %s2322 = scalar_lea.vmem [#allocation8], %s2321
          %2323 = dma.done %s2319, 128
        $region48: #{tpu_custom_call.1} parent=43 // pred_fallthru
          _
      $region44: #{tpu_custom_call.1} parent=5 // pred_fallthru
        _
    $region6: #{tpu_custom_call.1} parent=1 // loop_footer
      %s19 = sadd.s32 1, %s15
    $region7: #{tpu_custom_call.1} parent=1 // loop_footer_branch
      %14 = sbr.rel target = $region3
    $region8: #{tpu_custom_call.1} parent=1 // loop_exit
      _
    %2324 = vsyncpa [#allocation4], 1
    %s2325 = scalar_lea.sflag [#allocation4], 1
    %2326 = vsyncpa %s2325, 1
    %2327 = vsyncpa [#allocation7], 1
    %s2328 = scalar_lea.sflag [#allocation7], 1
    %2329 = vsyncpa %s2328, 1
    %2330 = vsyncpa [#allocation5], 1
    %s2331 = scalar_lea.sflag [#allocation5], 1
    %2332 = vsyncpa %s2331, 1

</llo_original>
